<compile_context>
chip_gen: v7x
topology: tpu7x:2x2x1
jax: 0.10.0
libtpu: 0.0.40
codegen_flags: <defaults>
</compile_context>

<pallas_src>
import numpy as np
import jax
import jax.numpy as jnp
from jax import lax
from jax.experimental import pallas as pl
from jax.experimental.pallas import tpu as pltpu

# ----- configuration: ResBlockDown(in_channels=4, out_channels=8, downsample=True) -----
N, CIN, H, W = 2, 4, 16, 16
COUT = 8
CH = COUT                                   # hidden_channels defaults to out_channels
DOWNSAMPLE = True
LEARNABLE_SC = (CIN != COUT) or DOWNSAMPLE  # True for this configuration
assert DOWNSAMPLE and LEARNABLE_SC          # kernel specializes this path

CP = 8                                      # x channels padded to one sublane group; row CP-1 = ones (bias) channel
assert CH == CP                             # one (CP + 9*CH)-row operand scratch serves both convs
HQ, WQ = H + 4, W + 4                       # 20, 20 zero-padded grid (pad=2 per side)
L = HQ * WQ                                 # 400 flattened padded pixels per sample
NL = N * L                                  # 800: batch folded onto the lane axis
EXTH = WQ + 1                               # 21: max |tap shift| of a 3x3 conv
NH1 = NL + 2 * EXTH                         # 842: h1 carries a zero guard band per side
EXTX = 2 * EXTH                             # 42: guard on x so c1 taps for h1 guards are in-bounds
LX = NL + 2 * EXTX                          # 884
HO, WO = H // 2, W // 2                     # 8, 8 pooled output
HOWO = HO * WO                              # 64
NJ = N * HOWO                               # 128 pooled outputs -> exactly one lane group
KTOT = CP + 9 * CH                          # 80 fused operand rows: [x/shortcut group | 9 tap groups]
assert NJ == 128
TAP_OFFS = [(ky - 1) * WQ + (kx - 1) for ky in range(3) for kx in range(3)]


def _tap(buf, t, width):
    d = TAP_OFFS[t]
    return buf[:, EXTH + d:EXTH + d + width]


def resblock_down_kernel(x_ref, w_ref, p_ref, mask_ref, o_ref, xcat_ref):
    x_all = x_ref[...]                               # (CP, LX) f32; row CP-1 is all-ones
    xr = jnp.maximum(x_all, 0.0)                     # relu(x), hoisted once (ones row stays 1)

    w1m = w_ref[0:CH, :].astype(jnp.bfloat16)        # (CH, KTOT)  c1 taps (+b1 via ones channel)
    w2f = w_ref[CH:2 * CH, :].astype(jnp.bfloat16)   # (COUT, KTOT) c2 taps | 1x1 shortcut | b2+bsc

    # ---- phase A: operand = [raw x | 9 relu(x) taps] in bf16; two 8-row groups per store
    #      (one full packed bf16 sublane tile). The x group has zero weight in w1m. ----
    a_pairs = [(x_all[:, EXTX:EXTX + NH1], _tap(xr, 0, NH1)),
               (_tap(xr, 1, NH1), _tap(xr, 2, NH1)),
               (_tap(xr, 3, NH1), _tap(xr, 4, NH1)),
               (_tap(xr, 5, NH1), _tap(xr, 6, NH1)),
               (_tap(xr, 7, NH1), _tap(xr, 8, NH1))]
    for g, (top, bot) in enumerate(a_pairs):
        xcat_ref[16 * g:16 * (g + 1), :] = jnp.concatenate(
            [top, bot], axis=0).astype(jnp.bfloat16)

    # ---- c1 (+ b1) as ONE MXU matmul, K=80; relu + padding/guard mask in f32 on the VPU ----
    h1 = jnp.dot(w1m, xcat_ref[...], preferred_element_type=jnp.float32)       # (CH, NH1)
    h1 = jnp.maximum(h1, 0.0) * mask_ref[...]

    # ---- phase B: operand = [raw x core | 9 masked-h1 taps] over the NL core lanes ----
    xc = x_all[:, EXTX:EXTX + NL]
    b_pairs = [(xc, _tap(h1, 0, NL)),
               (_tap(h1, 1, NL), _tap(h1, 2, NL)),
               (_tap(h1, 3, NL), _tap(h1, 4, NL)),
               (_tap(h1, 5, NL), _tap(h1, 6, NL)),
               (_tap(h1, 7, NL), _tap(h1, 8, NL))]
    for g, (top, bot) in enumerate(b_pairs):
        xcat_ref[16 * g:16 * (g + 1), :NL] = jnp.concatenate(
            [top, bot], axis=0).astype(jnp.bfloat16)

    # ---- c2 + 1x1 shortcut + (b2 + bsc), all fused in ONE matmul over K=80 ----
    tot = jnp.dot(w2f, xcat_ref[:, :NL], preferred_element_type=jnp.float32)   # (COUT, NL)

    # ---- avg_pool2d(2) + stride-2 anchor pick as one matmul against a 0/0.25 selection
    #      matrix -> a single dense (COUT, 128) result; no post-kernel gather needed ----
    pooled = jnp.dot(tot.astype(jnp.bfloat16), p_ref[...],
                     preferred_element_type=jnp.float32)                       # (COUT, NJ)
    for n in range(N):
        o_ref[n * COUT:(n + 1) * COUT, :] = pooled[:, n * HOWO:(n + 1) * HOWO]


def _spectral_normalize(w, n_iter=5):
    # spectral_norm reparameterization: divide by largest singular value of W.reshape(out,-1).
    wm = w.reshape(w.shape[0], -1)
    u = jnp.full((wm.shape[0],), 1.0 / np.sqrt(wm.shape[0]), wm.dtype)
    v = None
    for _ in range(n_iter):
        v = wm.T @ u
        v = v / (jnp.linalg.norm(v) + 1e-12)
        u = wm @ v
        u = u / (jnp.linalg.norm(u) + 1e-12)
    sigma = u @ (wm @ v)
    return w / sigma


def _build_constants():
    # mask over h1 buffer positions (ph = EXTH + core position): 1 only at real image pixels
    m = np.zeros((NH1,), np.float32)
    for n in range(N):
        for y in range(2, H + 2):
            base = EXTH + n * L + y * WQ
            m[base + 2: base + W + 2] = 1.0
    # pooling + anchor selection matrix: column j = (n, oy, ox); its four nonzero rows are the
    # flattened core positions of that 2x2 window, value 0.25 (exact in bf16)
    pmat = np.zeros((NL, NJ), np.float32)
    for n in range(N):
        for oy in range(HO):
            for ox in range(WO):
                j = n * HOWO + oy * WO + ox
                for dy in range(2):
                    for dx in range(2):
                        p = n * L + (2 + 2 * oy + dy) * WQ + (2 + 2 * ox + dx)
                        pmat[p, j] = 0.25
    return jnp.asarray(m.reshape(1, NH1)), jnp.asarray(pmat, dtype=jnp.bfloat16)


def init_params(key):
    k1, k2, k3, k4, k5, k6 = jax.random.split(key, 6)
    w1 = 0.1 * jax.random.normal(k1, (CH, CIN, 3, 3), jnp.float32)
    b1 = 0.1 * jax.random.normal(k2, (CH,), jnp.float32)
    w2 = 0.1 * jax.random.normal(k3, (COUT, CH, 3, 3), jnp.float32)
    b2 = 0.1 * jax.random.normal(k4, (COUT,), jnp.float32)
    w1n = _spectral_normalize(w1)
    w2n = _spectral_normalize(w2)
    if LEARNABLE_SC:
        wsc = 0.1 * jax.random.normal(k5, (COUT, CIN, 1, 1), jnp.float32)
        bsc = 0.1 * jax.random.normal(k6, (COUT,), jnp.float32)
    else:
        wsc = jnp.eye(CIN, dtype=jnp.float32)[:, :, None, None]
        bsc = jnp.zeros((COUT,), jnp.float32)
    return (w1n, b1, w2n, b2, wsc, bsc)


def pack_params(p):
    """Fused weight matrix (2*CH, KTOT) f32: rows 0..CH-1 = c1, rows CH.. = c2|shortcut.
    Column layout matches the operand scratch rows:
      cols [0, CP)        : raw-x / shortcut channel group (channel CP-1 is the constant-1 row)
      cols CP + 8*t + c   : conv tap t = ky*3+kx, channel c
    Biases ride the constant-1 channel: b1 in c1's center tap column, b2+bsc in the x-group.
    """
    w1n, b1, w2n, b2, wsc, bsc = p
    w1flat = jnp.pad(jnp.transpose(w1n, (0, 2, 3, 1)),
                     ((0, 0), (0, 0), (0, 0), (0, CP - CIN))).reshape(CH, 9 * CP)
    w1flat = w1flat.at[:, 4 * CP + (CP - 1)].set(b1)          # b1 via ones channel, center tap
    w1m = jnp.pad(w1flat, ((0, 0), (CP, 0)))                  # zero weight on the raw-x group
    w2flat = jnp.transpose(w2n, (0, 2, 3, 1)).reshape(COUT, 9 * CH)
    wsc_cols = jnp.pad(wsc[:, :, 0, 0], ((0, 0), (0, CP - wsc.shape[1])))
    wsc_cols = wsc_cols.at[:, CP - 1].set(b2 + bsc)           # fused c2 + shortcut bias
    w2f = jnp.concatenate([wsc_cols, w2flat], axis=1)
    return jnp.concatenate([w1m, w2f], axis=0).astype(jnp.float32)


@jax.jit
def resblock_down(x_nchw, wcat, pmat, mask):
    # glue (fused with the kernel under this jit): NCHW -> channels-on-sublanes,
    # guarded flattened padded grid on lanes, plus the constant-one bias channel.
    xp = jnp.pad(x_nchw.astype(jnp.float32),
                 ((0, 0), (0, CP - CIN), (2, 2), (2, 2)))                # (N, CP, HQ, WQ)
    xflat = jnp.transpose(xp.reshape(N, CP, L), (1, 0, 2)).reshape(CP, NL)
    xbuf = jnp.pad(xflat, ((0, 0), (EXTX, EXTX)))                        # (CP, LX)
    xbuf = xbuf.at[CP - 1, :].set(1.0)                                   # ones (bias) channel

    out2d = pl.pallas_call(
        resblock_down_kernel,
        out_shape=jax.ShapeDtypeStruct((N * COUT, HOWO), jnp.float32),
        grid_spec=pltpu.PrefetchScalarGridSpec(
            num_scalar_prefetch=0,
            grid=(1,),
            in_specs=[
                pl.BlockSpec((CP, LX), lambda i: (0, 0)),
                pl.BlockSpec((2 * CH, KTOT), lambda i: (0, 0)),
                pl.BlockSpec((NL, NJ), lambda i: (0, 0)),
                pl.BlockSpec((1, NH1), lambda i: (0, 0)),
            ],
            out_specs=pl.BlockSpec((N * COUT, HOWO), lambda i: (0, 0)),
            scratch_shapes=[pltpu.VMEM((KTOT, NH1), jnp.bfloat16)],
        ),
        # Single grid step; with a larger batch, add a leading batch-chunk grid axis with
        # dimension_semantics=("parallel", "arbitrary") to use both v7x TensorCores.
        compiler_params=pltpu.CompilerParams(dimension_semantics=("arbitrary",)),
    )(xbuf, wcat, pmat, mask)

    # pure bitcast-reshape (no gather, no transpose): kernel already wrote (N*COUT, HO*WO)
    return out2d.reshape(N, COUT, HO, WO)


def reference(x, p):
    # pure-JAX reference of the PyTorch forward (NCHW, f32)
    w1n, b1, w2n, b2, wsc, bsc = p
    dn = ('NCHW', 'OIHW', 'NCHW')
    conv = lambda a, w, pad: lax.conv_general_dilated(
        a, w, (1, 1), ((pad, pad), (pad, pad)), dimension_numbers=dn,
        precision=lax.Precision.HIGHEST)
    pool2 = lambda a: lax.reduce_window(a, 0.0, lax.add,
                                        (1, 1, 2, 2), (1, 1, 2, 2), 'VALID') * 0.25
    h = jax.nn.relu(x)
    h = conv(h, w1n, 1) + b1[None, :, None, None]
    h = jax.nn.relu(h)
    h = conv(h, w2n, 1) + b2[None, :, None, None]
    if DOWNSAMPLE:
        h = pool2(h)
    xs = x
    if LEARNABLE_SC:
        xs = conv(x, wsc, 0) + bsc[None, :, None, None]
        if DOWNSAMPLE:
            xs = pool2(xs)
    return h + xs


if __name__ == "__main__":
    key = jax.random.PRNGKey(0)
    kx, kp = jax.random.split(key)
    x = jax.random.normal(kx, (N, CIN, H, W), jnp.float32)

    params = init_params(kp)
    wcat = pack_params(params)
    mask, pmat = _build_constants()

    out = resblock_down(x, wcat, pmat, mask)
    out = jax.block_until_ready(out)

    ref = reference(x, params)
    assert out.shape == ref.shape
    # bf16 MXU operands (f32 accumulation) vs. an all-f32 reference -> 2e-2 tolerance
    if not bool(jnp.allclose(out, ref, atol=2e-2, rtol=2e-2)):
        raise AssertionError("Pallas ResBlockDown output does not match reference")
    print("KERNEL_OK")
</pallas_src>

<mosaic_0001>
module attributes {stable_mosaic.version = 11 : i64} {
  func.func @resblock_down_kernel(%arg0: i32, %arg1: memref<8x884xf32, #tpu.memory_space<vmem>>, %arg2: memref<16x80xf32, #tpu.memory_space<vmem>>, %arg3: memref<800x128xbf16, #tpu.memory_space<vmem>>, %arg4: memref<1x842xf32, #tpu.memory_space<vmem>>, %arg5: memref<16x64xf32, #tpu.memory_space<vmem>>, %arg6: memref<80x842xbf16, #tpu.memory_space<vmem>>) attributes {dimension_semantics = [#tpu.dimension_semantics<arbitrary>], iteration_bounds = array<i64: 1>, scalar_prefetch = 0 : i64, scratch_operands = 1 : i64, tpu.core_type = #tpu.core_type<tc>, window_params = [{pipeline_mode = #tpu.pipeline_mode<synchronous>, transform_indices = @transform_0, window_bounds = array<i64: 8, 884>}, {pipeline_mode = #tpu.pipeline_mode<synchronous>, transform_indices = @transform_1, window_bounds = array<i64: 16, 80>}, {pipeline_mode = #tpu.pipeline_mode<synchronous>, transform_indices = @transform_2, window_bounds = array<i64: 800, 128>}, {pipeline_mode = #tpu.pipeline_mode<synchronous>, transform_indices = @transform_3, window_bounds = array<i64: 1, 842>}, {pipeline_mode = #tpu.pipeline_mode<synchronous>, transform_indices = @transform_4, window_bounds = array<i64: 16, 64>}]} {
    %c0 = arith.constant 0 : index
    %c0_0 = arith.constant 0 : index
    %0 = vector.load %arg1[%c0, %c0_0] : memref<8x884xf32, #tpu.memory_space<vmem>>, vector<8x884xf32>
    %cst = arith.constant 0.000000e+00 : f32
    %1 = vector.broadcast %cst : f32 to vector<8x884xf32>
    %2 = arith.maximumf %0, %1 : vector<8x884xf32>
    %c0_1 = arith.constant 0 : index
    %c0_2 = arith.constant 0 : index
    %3 = vector.load %arg2[%c0_1, %c0_2] : memref<16x80xf32, #tpu.memory_space<vmem>>, vector<8x80xf32>
    %4 = arith.truncf %3 : vector<8x80xf32> to vector<8x80xbf16>
    %c8 = arith.constant 8 : index
    %c0_3 = arith.constant 0 : index
    %5 = vector.load %arg2[%c8, %c0_3] : memref<16x80xf32, #tpu.memory_space<vmem>>, vector<8x80xf32>
    %6 = arith.truncf %5 : vector<8x80xf32> to vector<8x80xbf16>
    %7 = vector.extract_strided_slice %0 {offsets = [0, 42], sizes = [8, 842], strides = [1, 1]} : vector<8x884xf32> to vector<8x842xf32>
    %8 = vector.extract_strided_slice %2 {offsets = [0, 0], sizes = [8, 842], strides = [1, 1]} : vector<8x884xf32> to vector<8x842xf32>
    %9 = vector.extract_strided_slice %2 {offsets = [0, 1], sizes = [8, 842], strides = [1, 1]} : vector<8x884xf32> to vector<8x842xf32>
    %10 = vector.extract_strided_slice %2 {offsets = [0, 2], sizes = [8, 842], strides = [1, 1]} : vector<8x884xf32> to vector<8x842xf32>
    %11 = vector.extract_strided_slice %2 {offsets = [0, 20], sizes = [8, 842], strides = [1, 1]} : vector<8x884xf32> to vector<8x842xf32>
    %12 = vector.extract_strided_slice %2 {offsets = [0, 21], sizes = [8, 842], strides = [1, 1]} : vector<8x884xf32> to vector<8x842xf32>
    %13 = vector.extract_strided_slice %2 {offsets = [0, 22], sizes = [8, 842], strides = [1, 1]} : vector<8x884xf32> to vector<8x842xf32>
    %14 = vector.extract_strided_slice %2 {offsets = [0, 40], sizes = [8, 842], strides = [1, 1]} : vector<8x884xf32> to vector<8x842xf32>
    %15 = vector.extract_strided_slice %2 {offsets = [0, 41], sizes = [8, 842], strides = [1, 1]} : vector<8x884xf32> to vector<8x842xf32>
    %16 = vector.extract_strided_slice %2 {offsets = [0, 42], sizes = [8, 842], strides = [1, 1]} : vector<8x884xf32> to vector<8x842xf32>
    %17 = tpu.concatenate %7, %8 in 0 : vector<8x842xf32>, vector<8x842xf32> -> vector<16x842xf32>
    %18 = arith.truncf %17 : vector<16x842xf32> to vector<16x842xbf16>
    %c0_4 = arith.constant 0 : index
    %c0_5 = arith.constant 0 : index
    %19 = vector.load %arg6[%c0_4, %c0_5] : memref<80x842xbf16, #tpu.memory_space<vmem>>, vector<16x842xbf16>
    tpu.vector_store %arg6[%c0_4, %c0_5], %18 {strides = array<i32>} : memref<80x842xbf16, #tpu.memory_space<vmem>>, vector<16x842xbf16>,
    %20 = tpu.concatenate %9, %10 in 0 : vector<8x842xf32>, vector<8x842xf32> -> vector<16x842xf32>
    %21 = arith.truncf %20 : vector<16x842xf32> to vector<16x842xbf16>
    %c16 = arith.constant 16 : index
    %c0_6 = arith.constant 0 : index
    %22 = vector.load %arg6[%c16, %c0_6] : memref<80x842xbf16, #tpu.memory_space<vmem>>, vector<16x842xbf16>
    tpu.vector_store %arg6[%c16, %c0_6], %21 {strides = array<i32>} : memref<80x842xbf16, #tpu.memory_space<vmem>>, vector<16x842xbf16>,
    %23 = tpu.concatenate %11, %12 in 0 : vector<8x842xf32>, vector<8x842xf32> -> vector<16x842xf32>
    %24 = arith.truncf %23 : vector<16x842xf32> to vector<16x842xbf16>
    %c32 = arith.constant 32 : index
    %c0_7 = arith.constant 0 : index
    %25 = vector.load %arg6[%c32, %c0_7] : memref<80x842xbf16, #tpu.memory_space<vmem>>, vector<16x842xbf16>
    tpu.vector_store %arg6[%c32, %c0_7], %24 {strides = array<i32>} : memref<80x842xbf16, #tpu.memory_space<vmem>>, vector<16x842xbf16>,
    %26 = tpu.concatenate %13, %14 in 0 : vector<8x842xf32>, vector<8x842xf32> -> vector<16x842xf32>
    %27 = arith.truncf %26 : vector<16x842xf32> to vector<16x842xbf16>
    %c48 = arith.constant 48 : index
    %c0_8 = arith.constant 0 : index
    %28 = vector.load %arg6[%c48, %c0_8] : memref<80x842xbf16, #tpu.memory_space<vmem>>, vector<16x842xbf16>
    tpu.vector_store %arg6[%c48, %c0_8], %27 {strides = array<i32>} : memref<80x842xbf16, #tpu.memory_space<vmem>>, vector<16x842xbf16>,
    %29 = tpu.concatenate %15, %16 in 0 : vector<8x842xf32>, vector<8x842xf32> -> vector<16x842xf32>
    %30 = arith.truncf %29 : vector<16x842xf32> to vector<16x842xbf16>
    %c64 = arith.constant 64 : index
    %c0_9 = arith.constant 0 : index
    %31 = vector.load %arg6[%c64, %c0_9] : memref<80x842xbf16, #tpu.memory_space<vmem>>, vector<16x842xbf16>
    tpu.vector_store %arg6[%c64, %c0_9], %30 {strides = array<i32>} : memref<80x842xbf16, #tpu.memory_space<vmem>>, vector<16x842xbf16>,
    %c0_10 = arith.constant 0 : index
    %c0_11 = arith.constant 0 : index
    %32 = vector.load %arg6[%c0_10, %c0_11] : memref<80x842xbf16, #tpu.memory_space<vmem>>, vector<80x842xbf16>
    %cst_12 = arith.constant dense<0.000000e+00> : vector<8x842xf32>
    %33 = tpu.matmul %4, %32, %cst_12 {dimension_numbers = #tpu.dot_dimension_numbers<[1], [0], [0], [1], [0, 0, 1, 1], [], []>} : vector<8x80xbf16>, vector<80x842xbf16>, vector<8x842xf32> -> vector<8x842xf32>
    %cst_13 = arith.constant 0.000000e+00 : f32
    %34 = vector.broadcast %cst_13 : f32 to vector<8x842xf32>
    %35 = arith.maximumf %33, %34 : vector<8x842xf32>
    %c0_14 = arith.constant 0 : index
    %c0_15 = arith.constant 0 : index
    %36 = vector.load %arg4[%c0_14, %c0_15] : memref<1x842xf32, #tpu.memory_space<vmem>>, vector<1x842xf32>
    %37 = vector.broadcast %36 : vector<1x842xf32> to vector<8x842xf32>
    %38 = arith.mulf %35, %37 : vector<8x842xf32>
    %39 = vector.extract_strided_slice %0 {offsets = [0, 42], sizes = [8, 800], strides = [1, 1]} : vector<8x884xf32> to vector<8x800xf32>
    %40 = vector.extract_strided_slice %38 {offsets = [0, 0], sizes = [8, 800], strides = [1, 1]} : vector<8x842xf32> to vector<8x800xf32>
    %41 = vector.extract_strided_slice %38 {offsets = [0, 1], sizes = [8, 800], strides = [1, 1]} : vector<8x842xf32> to vector<8x800xf32>
    %42 = vector.extract_strided_slice %38 {offsets = [0, 2], sizes = [8, 800], strides = [1, 1]} : vector<8x842xf32> to vector<8x800xf32>
    %43 = vector.extract_strided_slice %38 {offsets = [0, 20], sizes = [8, 800], strides = [1, 1]} : vector<8x842xf32> to vector<8x800xf32>
    %44 = vector.extract_strided_slice %38 {offsets = [0, 21], sizes = [8, 800], strides = [1, 1]} : vector<8x842xf32> to vector<8x800xf32>
    %45 = vector.extract_strided_slice %38 {offsets = [0, 22], sizes = [8, 800], strides = [1, 1]} : vector<8x842xf32> to vector<8x800xf32>
    %46 = vector.extract_strided_slice %38 {offsets = [0, 40], sizes = [8, 800], strides = [1, 1]} : vector<8x842xf32> to vector<8x800xf32>
    %47 = vector.extract_strided_slice %38 {offsets = [0, 41], sizes = [8, 800], strides = [1, 1]} : vector<8x842xf32> to vector<8x800xf32>
    %48 = vector.extract_strided_slice %38 {offsets = [0, 42], sizes = [8, 800], strides = [1, 1]} : vector<8x842xf32> to vector<8x800xf32>
    %49 = tpu.concatenate %39, %40 in 0 : vector<8x800xf32>, vector<8x800xf32> -> vector<16x800xf32>
    %50 = arith.truncf %49 : vector<16x800xf32> to vector<16x800xbf16>
    %c0_16 = arith.constant 0 : index
    %c0_17 = arith.constant 0 : index
    %51 = vector.load %arg6[%c0_16, %c0_17] : memref<80x842xbf16, #tpu.memory_space<vmem>>, vector<16x800xbf16>
    tpu.vector_store %arg6[%c0_16, %c0_17], %50 {strides = array<i32>} : memref<80x842xbf16, #tpu.memory_space<vmem>>, vector<16x800xbf16>,
    %52 = tpu.concatenate %41, %42 in 0 : vector<8x800xf32>, vector<8x800xf32> -> vector<16x800xf32>
    %53 = arith.truncf %52 : vector<16x800xf32> to vector<16x800xbf16>
    %c16_18 = arith.constant 16 : index
    %c0_19 = arith.constant 0 : index
    %54 = vector.load %arg6[%c16_18, %c0_19] : memref<80x842xbf16, #tpu.memory_space<vmem>>, vector<16x800xbf16>
    tpu.vector_store %arg6[%c16_18, %c0_19], %53 {strides = array<i32>} : memref<80x842xbf16, #tpu.memory_space<vmem>>, vector<16x800xbf16>,
    %55 = tpu.concatenate %43, %44 in 0 : vector<8x800xf32>, vector<8x800xf32> -> vector<16x800xf32>
    %56 = arith.truncf %55 : vector<16x800xf32> to vector<16x800xbf16>
    %c32_20 = arith.constant 32 : index
    %c0_21 = arith.constant 0 : index
    %57 = vector.load %arg6[%c32_20, %c0_21] : memref<80x842xbf16, #tpu.memory_space<vmem>>, vector<16x800xbf16>
    tpu.vector_store %arg6[%c32_20, %c0_21], %56 {strides = array<i32>} : memref<80x842xbf16, #tpu.memory_space<vmem>>, vector<16x800xbf16>,
    %58 = tpu.concatenate %45, %46 in 0 : vector<8x800xf32>, vector<8x800xf32> -> vector<16x800xf32>
    %59 = arith.truncf %58 : vector<16x800xf32> to vector<16x800xbf16>
    %c48_22 = arith.constant 48 : index
    %c0_23 = arith.constant 0 : index
    %60 = vector.load %arg6[%c48_22, %c0_23] : memref<80x842xbf16, #tpu.memory_space<vmem>>, vector<16x800xbf16>
    tpu.vector_store %arg6[%c48_22, %c0_23], %59 {strides = array<i32>} : memref<80x842xbf16, #tpu.memory_space<vmem>>, vector<16x800xbf16>,
    %61 = tpu.concatenate %47, %48 in 0 : vector<8x800xf32>, vector<8x800xf32> -> vector<16x800xf32>
    %62 = arith.truncf %61 : vector<16x800xf32> to vector<16x800xbf16>
    %c64_24 = arith.constant 64 : index
    %c0_25 = arith.constant 0 : index
    %63 = vector.load %arg6[%c64_24, %c0_25] : memref<80x842xbf16, #tpu.memory_space<vmem>>, vector<16x800xbf16>
    tpu.vector_store %arg6[%c64_24, %c0_25], %62 {strides = array<i32>} : memref<80x842xbf16, #tpu.memory_space<vmem>>, vector<16x800xbf16>,
    %c0_26 = arith.constant 0 : index
    %c0_27 = arith.constant 0 : index
    %64 = vector.load %arg6[%c0_26, %c0_27] : memref<80x842xbf16, #tpu.memory_space<vmem>>, vector<80x800xbf16>
    %cst_28 = arith.constant dense<0.000000e+00> : vector<8x800xf32>
    %65 = tpu.matmul %6, %64, %cst_28 {dimension_numbers = #tpu.dot_dimension_numbers<[1], [0], [0], [1], [0, 0, 1, 1], [], []>} : vector<8x80xbf16>, vector<80x800xbf16>, vector<8x800xf32> -> vector<8x800xf32>
    %66 = arith.truncf %65 : vector<8x800xf32> to vector<8x800xbf16>
    %c0_29 = arith.constant 0 : index
    %c0_30 = arith.constant 0 : index
    %67 = vector.load %arg3[%c0_29, %c0_30] : memref<800x128xbf16, #tpu.memory_space<vmem>>, vector<800x128xbf16>
    %cst_31 = arith.constant dense<0.000000e+00> : vector<8x128xf32>
    %68 = tpu.matmul %66, %67, %cst_31 {dimension_numbers = #tpu.dot_dimension_numbers<[1], [0], [0], [1], [0, 0, 1, 1], [], []>} : vector<8x800xbf16>, vector<800x128xbf16>, vector<8x128xf32> -> vector<8x128xf32>
    %69 = vector.extract_strided_slice %68 {offsets = [0, 0], sizes = [8, 64], strides = [1, 1]} : vector<8x128xf32> to vector<8x64xf32>
    %c0_32 = arith.constant 0 : index
    %c0_33 = arith.constant 0 : index
    %70 = vector.load %arg5[%c0_32, %c0_33] : memref<16x64xf32, #tpu.memory_space<vmem>>, vector<8x64xf32>
    tpu.vector_store %arg5[%c0_32, %c0_33], %69 {strides = array<i32>} : memref<16x64xf32, #tpu.memory_space<vmem>>, vector<8x64xf32>,
    %71 = vector.extract_strided_slice %68 {offsets = [0, 64], sizes = [8, 64], strides = [1, 1]} : vector<8x128xf32> to vector<8x64xf32>
    %c8_34 = arith.constant 8 : index
    %c0_35 = arith.constant 0 : index
    %72 = vector.load %arg5[%c8_34, %c0_35] : memref<16x64xf32, #tpu.memory_space<vmem>>, vector<8x64xf32>
    tpu.vector_store %arg5[%c8_34, %c0_35], %71 {strides = array<i32>} : memref<16x64xf32, #tpu.memory_space<vmem>>, vector<8x64xf32>,
    return
  }
  func.func @transform_0(%arg0: i32) -> (i32, i32) {
    %c0_i32 = arith.constant 0 : i32
    %c0_i32_0 = arith.constant 0 : i32
    %c0_i32_1 = arith.constant 0 : i32
    return %c0_i32, %c0_i32_0 : i32, i32
  }
  func.func @transform_1(%arg0: i32) -> (i32, i32) {
    %c0_i32 = arith.constant 0 : i32
    %c0_i32_0 = arith.constant 0 : i32
    %c0_i32_1 = arith.constant 0 : i32
    return %c0_i32, %c0_i32_0 : i32, i32
  }
  func.func @transform_2(%arg0: i32) -> (i32, i32) {
    %c0_i32 = arith.constant 0 : i32
    %c0_i32_0 = arith.constant 0 : i32
    %c0_i32_1 = arith.constant 0 : i32
    return %c0_i32, %c0_i32_0 : i32, i32
  }
  func.func @transform_3(%arg0: i32) -> (i32, i32) {
    %c0_i32 = arith.constant 0 : i32
    %c0_i32_0 = arith.constant 0 : i32
    %c0_i32_1 = arith.constant 0 : i32
    return %c0_i32, %c0_i32_0 : i32, i32
  }
  func.func @transform_4(%arg0: i32) -> (i32, i32) {
    %c0_i32 = arith.constant 0 : i32
    %c0_i32_0 = arith.constant 0 : i32
    %c0_i32_1 = arith.constant 0 : i32
    return %c0_i32, %c0_i32_0 : i32, i32
  }
}

</mosaic_0001>

<llo_original>
// kernel: resblock_down.1
$region0: #{resblock_down.1}
  #allocation0 [shape = 'u32[]', space=smem, size = 0x4, offset = 0x4, fixed_abs, tag = 'smem constant byte address 0x4 - core index']
  #allocation1 [shape = 'u32[144,128]{1,0:T(1,128)}', space=vmem, size = 0x12000, scoped, tag = 'internal scratch']
  #allocation2 [shape = 'bf16[80,842]{1,0:T(16,128)(2,1)}', space=vmem, size = 0x23000, scoped, tag = 'scratch operand']
  %s0 = inlined_call_operand.vmem [shape: f32[8,884], index: 0, kind: input, shape index: {}]
  %s1 = inlined_call_operand.vmem [shape: f32[16,80], index: 1, kind: input, shape index: {}]
  %s2 = inlined_call_operand.vmem [shape: bf16[800,128], index: 2, kind: input, shape index: {}]
  %s3 = inlined_call_operand.vmem [shape: f32[1,842], index: 3, kind: input, shape index: {}]
  %s4 = inlined_call_operand.vmem [shape: f32[16,64], index: 4, kind: output, shape index: {}]
  %s5 = sld [smem:[#allocation0]]
  $region26: #{resblock_down.1} parent=0
    _
  %s7 = ssub.s32 1, %s5
  %s8 = scalar_select 0, %s7, %s5
  // Predicated region
  $region2: #{resblock_down.1} parent=0 // pred_check
    _
  $region3: #{resblock_down.1} parent=0 // pred_check_branch
    %10 = sbr.rel (0) target = $region5
  $region4: #{resblock_down.1} parent=0 // pred_region
    _
  $region5: #{resblock_down.1} parent=0 // pred_fallthru
    _
  // Predicated region
  $region6: #{resblock_down.1} parent=0 // pred_check
    _
  $region7: #{resblock_down.1} parent=0 // pred_check_branch
    %12 = sbr.rel (0) target = $region9
  $region8: #{resblock_down.1} parent=0 // pred_region
    _
  $region9: #{resblock_down.1} parent=0 // pred_fallthru
    _
  // Predicated region
  $region10: #{resblock_down.1} parent=0 // pred_check
    _
  $region11: #{resblock_down.1} parent=0 // pred_check_branch
    %14 = sbr.rel (0) target = $region13
  $region12: #{resblock_down.1} parent=0 // pred_region
    _
  $region13: #{resblock_down.1} parent=0 // pred_fallthru
    _
  // Predicated region
  $region14: #{resblock_down.1} parent=0 // pred_check
    _
  $region15: #{resblock_down.1} parent=0 // pred_check_branch
    %16 = sbr.rel (0) target = $region17
  $region16: #{resblock_down.1} parent=0 // pred_region
    _
  $region17: #{resblock_down.1} parent=0 // pred_fallthru
    _
  %v18 = vld [vmem:[%s0] sm:$0xff]
  %v19 = vld [vmem:[%s0 + $0x8] sm:$0xff]
  %v20 = vld [vmem:[%s0 + $0x10] sm:$0xff]
  %v21 = vld [vmem:[%s0 + $0x18] sm:$0xff]
  %v22 = vld [vmem:[%s0 + $0x20] sm:$0xff]
  %v23 = vld [vmem:[%s0 + $0x28] sm:$0xff]
  %v24 = vld [vmem:[%s0 + $0x30] sm:$0xff]
  %v25 = vmax.f32 %v18, 0.0
  %v26 = vmax.f32 %v19, 0.0
  %v27 = vmax.f32 %v20, 0.0
  %v28 = vmax.f32 %v21, 0.0
  %v29 = vmax.f32 %v22, 0.0
  %v30 = vmax.f32 %v23, 0.0
  %v31 = vmax.f32 %v24, 0.0
  %v32 = vld [vmem:[%s1] sm:$0xff]
  %v33 = vpack.c.bf16 %v32, %v32
  %v34 = vld [vmem:[%s1 + $0x8] sm:$0xff]
  %v35 = vpack.c.bf16 %v34, %v34
  %43 = vrot.lane.b32.xlu0 %v25, 42
  %v44 = vpop.permute.xlu0 %43
  %45 = vrot.lane.b32.xlu0 %v26, 42
  %v46 = vpop.permute.xlu0 %45
  %47 = vrot.lane.b32.xlu0 %v27, 42
  %v48 = vpop.permute.xlu0 %47
  %49 = vrot.lane.b32.xlu0 %v28, 42
  %v50 = vpop.permute.xlu0 %49
  %51 = vrot.lane.b32.xlu0 %v29, 42
  %v52 = vpop.permute.xlu0 %51
  %53 = vrot.lane.b32.xlu0 %v30, 42
  %v54 = vpop.permute.xlu0 %53
  %55 = vrot.lane.b32.xlu0 %v31, 42
  %v56 = vpop.permute.xlu0 %55
  %vm57 = vcmask 343040
  %v58 = vsel %vm57, %v44, %v46
  %v59 = vsel %vm57, %v46, %v48
  %v60 = vsel %vm57, %v48, %v50
  %v61 = vsel %vm57, %v50, %v52
  %v62 = vsel %vm57, %v52, %v54
  %v63 = vsel %vm57, %v54, %v56
  %v71 = vpack.c.bf16 %v44, %v18
  %v72 = vpack.c.bf16 %v58, %v19
  %v73 = vpack.c.bf16 %v59, %v20
  %v74 = vpack.c.bf16 %v60, %v21
  %v75 = vpack.c.bf16 %v61, %v22
  %v76 = vpack.c.bf16 %v62, %v23
  %v77 = vpack.c.bf16 %v63, %v24
  %85 = vrot.lane.b32.xlu0 %v71, 86
  %v86 = vpop.permute.xlu0 %85
  %87 = vrot.lane.b32.xlu0 %v72, 86
  %v88 = vpop.permute.xlu0 %87
  %89 = vrot.lane.b32.xlu0 %v73, 86
  %v90 = vpop.permute.xlu0 %89
  %91 = vrot.lane.b32.xlu0 %v74, 86
  %v92 = vpop.permute.xlu0 %91
  %93 = vrot.lane.b32.xlu0 %v75, 86
  %v94 = vpop.permute.xlu0 %93
  %95 = vrot.lane.b32.xlu0 %v76, 86
  %v96 = vpop.permute.xlu0 %95
  %97 = vrot.lane.b32.xlu0 %v77, 86
  %v98 = vpop.permute.xlu0 %97
  %vm99 = vcmask 703488
  %v100 = vsel %vm99, %v86, %v88
  %v101 = vsel %vm99, %v88, %v90
  %v102 = vsel %vm99, %v90, %v92
  %v103 = vsel %vm99, %v92, %v94
  %v104 = vsel %vm99, %v94, %v96
  %v105 = vsel %vm99, %v96, %v98
  %113 = vst [vmem:[#allocation2] sm:$0xff] %v100
  %114 = vst [vmem:[#allocation2 + $0x8] sm:$0xff] %v101
  %115 = vst [vmem:[#allocation2 + $0x10] sm:$0xff] %v102
  %116 = vst [vmem:[#allocation2 + $0x18] sm:$0xff] %v103
  %117 = vst [vmem:[#allocation2 + $0x20] sm:$0xff] %v104
  %118 = vst [vmem:[#allocation2 + $0x28] sm:$0xff] %v105
  %vm119 = vcmask 605184
  %120 = vst.msk [vmem:[#allocation2 + $0x30] sm:$0xff] %vm119, %v98
  %121 = vrot.lane.b32.xlu0 %v25, 127
  %v122 = vpop.permute.xlu0 %121
  %123 = vrot.lane.b32.xlu0 %v26, 127
  %v124 = vpop.permute.xlu0 %123
  %125 = vrot.lane.b32.xlu0 %v27, 127
  %v126 = vpop.permute.xlu0 %125
  %127 = vrot.lane.b32.xlu0 %v28, 127
  %v128 = vpop.permute.xlu0 %127
  %129 = vrot.lane.b32.xlu0 %v29, 127
  %v130 = vpop.permute.xlu0 %129
  %131 = vrot.lane.b32.xlu0 %v30, 127
  %v132 = vpop.permute.xlu0 %131
  %133 = vrot.lane.b32.xlu0 %v31, 127
  %v134 = vpop.permute.xlu0 %133
  %vm135 = vcmask 1039360
  %v136 = vsel %vm135, %v122, %v124
  %v137 = vsel %vm135, %v124, %v126
  %v138 = vsel %vm135, %v126, %v128
  %v139 = vsel %vm135, %v128, %v130
  %v140 = vsel %vm135, %v130, %v132
  %v141 = vsel %vm135, %v132, %v134
  %v149 = vpack.c.bf16 %v136, %v25
  %v150 = vpack.c.bf16 %v137, %v26
  %v151 = vpack.c.bf16 %v138, %v27
  %v152 = vpack.c.bf16 %v139, %v28
  %v153 = vpack.c.bf16 %v140, %v29
  %v154 = vpack.c.bf16 %v141, %v30
  %v155 = vpack.c.bf16 %v134, %v31
  %163 = vrot.lane.b32.xlu0 %v149, 127
  %v164 = vpop.permute.xlu0 %163
  %165 = vrot.lane.b32.xlu0 %v150, 127
  %v166 = vpop.permute.xlu0 %165
  %167 = vrot.lane.b32.xlu0 %v151, 127
  %v168 = vpop.permute.xlu0 %167
  %169 = vrot.lane.b32.xlu0 %v152, 127
  %v170 = vpop.permute.xlu0 %169
  %171 = vrot.lane.b32.xlu0 %v153, 127
  %v172 = vpop.permute.xlu0 %171
  %173 = vrot.lane.b32.xlu0 %v154, 127
  %v174 = vpop.permute.xlu0 %173
  %175 = vrot.lane.b32.xlu0 %v155, 127
  %v176 = vpop.permute.xlu0 %175
  %vm177 = vcmask 1039360
  %v178 = vsel %vm177, %v164, %v166
  %v179 = vsel %vm177, %v166, %v168
  %v180 = vsel %vm177, %v168, %v170
  %v181 = vsel %vm177, %v170, %v172
  %v182 = vsel %vm177, %v172, %v174
  %v183 = vsel %vm177, %v174, %v176
  %191 = vst [vmem:[#allocation2 + $0x38] sm:$0xff] %v178
  %192 = vst [vmem:[#allocation2 + $0x40] sm:$0xff] %v179
  %193 = vst [vmem:[#allocation2 + $0x48] sm:$0xff] %v180
  %194 = vst [vmem:[#allocation2 + $0x50] sm:$0xff] %v181
  %195 = vst [vmem:[#allocation2 + $0x58] sm:$0xff] %v182
  %196 = vst [vmem:[#allocation2 + $0x60] sm:$0xff] %v183
  %197 = vst.msk [vmem:[#allocation2 + $0x68] sm:$0xff] %vm119, %v176
  %198 = vrot.lane.b32.xlu0 %v149, 108
  %v199 = vpop.permute.xlu0 %198
  %200 = vrot.lane.b32.xlu0 %v150, 108
  %v201 = vpop.permute.xlu0 %200
  %202 = vrot.lane.b32.xlu0 %v151, 108
  %v203 = vpop.permute.xlu0 %202
  %204 = vrot.lane.b32.xlu0 %v152, 108
  %v205 = vpop.permute.xlu0 %204
  %206 = vrot.lane.b32.xlu0 %v153, 108
  %v207 = vpop.permute.xlu0 %206
  %208 = vrot.lane.b32.xlu0 %v154, 108
  %v209 = vpop.permute.xlu0 %208
  %210 = vrot.lane.b32.xlu0 %v155, 108
  %v211 = vpop.permute.xlu0 %210
  %vm212 = vcmask 883712
  %v213 = vsel %vm212, %v199, %v201
  %v214 = vsel %vm212, %v201, %v203
  %v215 = vsel %vm212, %v203, %v205
  %v216 = vsel %vm212, %v205, %v207
  %v217 = vsel %vm212, %v207, %v209
  %v218 = vsel %vm212, %v209, %v211
  %226 = vst [vmem:[#allocation2 + $0x70] sm:$0xff] %v213
  %227 = vst [vmem:[#allocation2 + $0x78] sm:$0xff] %v214
  %228 = vst [vmem:[#allocation2 + $0x80] sm:$0xff] %v215
  %229 = vst [vmem:[#allocation2 + $0x88] sm:$0xff] %v216
  %230 = vst [vmem:[#allocation2 + $0x90] sm:$0xff] %v217
  %231 = vst [vmem:[#allocation2 + $0x98] sm:$0xff] %v218
  %232 = vst.msk [vmem:[#allocation2 + $0xa0] sm:$0xff] %vm119, %v211
  %233 = vrot.lane.b32.xlu0 %v25, 110
  %v234 = vpop.permute.xlu0 %233
  %235 = vrot.lane.b32.xlu0 %v26, 110
  %v236 = vpop.permute.xlu0 %235
  %237 = vrot.lane.b32.xlu0 %v27, 110
  %v238 = vpop.permute.xlu0 %237
  %239 = vrot.lane.b32.xlu0 %v28, 110
  %v240 = vpop.permute.xlu0 %239
  %241 = vrot.lane.b32.xlu0 %v29, 110
  %v242 = vpop.permute.xlu0 %241
  %243 = vrot.lane.b32.xlu0 %v30, 110
  %v244 = vpop.permute.xlu0 %243
  %245 = vrot.lane.b32.xlu0 %v31, 110
  %v246 = vpop.permute.xlu0 %245
  %vm247 = vcmask 900096
  %v248 = vsel %vm247, %v234, %v236
  %v249 = vsel %vm247, %v236, %v238
  %v250 = vsel %vm247, %v238, %v240
  %v251 = vsel %vm247, %v240, %v242
  %v252 = vsel %vm247, %v242, %v244
  %v253 = vsel %vm247, %v244, %v246
  %v261 = vpack.c.bf16 %v248, %v25
  %v262 = vpack.c.bf16 %v249, %v26
  %v263 = vpack.c.bf16 %v250, %v27
  %v264 = vpack.c.bf16 %v251, %v28
  %v265 = vpack.c.bf16 %v252, %v29
  %v266 = vpack.c.bf16 %v253, %v30
  %v267 = vpack.c.bf16 %v246, %v31
  %275 = vrot.lane.b32.xlu0 %v261, 106
  %v276 = vpop.permute.xlu0 %275
  %277 = vrot.lane.b32.xlu0 %v262, 106
  %v278 = vpop.permute.xlu0 %277
  %279 = vrot.lane.b32.xlu0 %v263, 106
  %v280 = vpop.permute.xlu0 %279
  %281 = vrot.lane.b32.xlu0 %v264, 106
  %v282 = vpop.permute.xlu0 %281
  %283 = vrot.lane.b32.xlu0 %v265, 106
  %v284 = vpop.permute.xlu0 %283
  %285 = vrot.lane.b32.xlu0 %v266, 106
  %v286 = vpop.permute.xlu0 %285
  %287 = vrot.lane.b32.xlu0 %v267, 106
  %v288 = vpop.permute.xlu0 %287
  %vm289 = vcmask 867328
  %v290 = vsel %vm289, %v276, %v278
  %v291 = vsel %vm289, %v278, %v280
  %v292 = vsel %vm289, %v280, %v282
  %v293 = vsel %vm289, %v282, %v284
  %v294 = vsel %vm289, %v284, %v286
  %v295 = vsel %vm289, %v286, %v288
  %303 = vst [vmem:[#allocation2 + $0xa8] sm:$0xff] %v290
  %304 = vst [vmem:[#allocation2 + $0xb0] sm:$0xff] %v291
  %305 = vst [vmem:[#allocation2 + $0xb8] sm:$0xff] %v292
  %306 = vst [vmem:[#allocation2 + $0xc0] sm:$0xff] %v293
  %307 = vst [vmem:[#allocation2 + $0xc8] sm:$0xff] %v294
  %308 = vst [vmem:[#allocation2 + $0xd0] sm:$0xff] %v295
  %309 = vst.msk [vmem:[#allocation2 + $0xd8] sm:$0xff] %vm119, %v288
  %310 = vrot.lane.b32.xlu0 %v149, 87
  %v311 = vpop.permute.xlu0 %310
  %312 = vrot.lane.b32.xlu0 %v150, 87
  %v313 = vpop.permute.xlu0 %312
  %314 = vrot.lane.b32.xlu0 %v151, 87
  %v315 = vpop.permute.xlu0 %314
  %316 = vrot.lane.b32.xlu0 %v152, 87
  %v317 = vpop.permute.xlu0 %316
  %318 = vrot.lane.b32.xlu0 %v153, 87
  %v319 = vpop.permute.xlu0 %318
  %320 = vrot.lane.b32.xlu0 %v154, 87
  %v321 = vpop.permute.xlu0 %320
  %322 = vrot.lane.b32.xlu0 %v155, 87
  %v323 = vpop.permute.xlu0 %322
  %vm324 = vcmask 711680
  %v325 = vsel %vm324, %v311, %v313
  %v326 = vsel %vm324, %v313, %v315
  %v327 = vsel %vm324, %v315, %v317
  %v328 = vsel %vm324, %v317, %v319
  %v329 = vsel %vm324, %v319, %v321
  %v330 = vsel %vm324, %v321, %v323
  %338 = vst [vmem:[#allocation2 + $0xe0] sm:$0xff] %v325
  %339 = vst [vmem:[#allocation2 + $0xe8] sm:$0xff] %v326
  %340 = vst [vmem:[#allocation2 + $0xf0] sm:$0xff] %v327
  %341 = vst [vmem:[#allocation2 + $0xf8] sm:$0xff] %v328
  %342 = vst [vmem:[#allocation2 + $0x100] sm:$0xff] %v329
  %343 = vst [vmem:[#allocation2 + $0x108] sm:$0xff] %v330
  %344 = vst.msk [vmem:[#allocation2 + $0x110] sm:$0xff] %vm119, %v323
  %v345 = vld [vmem:[#allocation2] sm:$0xff]
  %v346 = vld [vmem:[#allocation2 + $0x8] sm:$0xff]
  %v347 = vld [vmem:[#allocation2 + $0x10] sm:$0xff]
  %v348 = vld [vmem:[#allocation2 + $0x18] sm:$0xff]
  %v349 = vld [vmem:[#allocation2 + $0x20] sm:$0xff]
  %v350 = vld [vmem:[#allocation2 + $0x28] sm:$0xff]
  %v351 = vld [vmem:[#allocation2 + $0x30] sm:$0xff]
  %v352 = vld [vmem:[#allocation2 + $0x38] sm:$0xff]
  %v353 = vld [vmem:[#allocation2 + $0x40] sm:$0xff]
  %v354 = vld [vmem:[#allocation2 + $0x48] sm:$0xff]
  %v355 = vld [vmem:[#allocation2 + $0x50] sm:$0xff]
  %v356 = vld [vmem:[#allocation2 + $0x58] sm:$0xff]
  %v357 = vld [vmem:[#allocation2 + $0x60] sm:$0xff]
  %v358 = vld [vmem:[#allocation2 + $0x68] sm:$0xff]
  %v359 = vld [vmem:[#allocation2 + $0x70] sm:$0xff]
  %v360 = vld [vmem:[#allocation2 + $0x78] sm:$0xff]
  %v361 = vld [vmem:[#allocation2 + $0x80] sm:$0xff]
  %v362 = vld [vmem:[#allocation2 + $0x88] sm:$0xff]
  %v363 = vld [vmem:[#allocation2 + $0x90] sm:$0xff]
  %v364 = vld [vmem:[#allocation2 + $0x98] sm:$0xff]
  %v365 = vld [vmem:[#allocation2 + $0xa0] sm:$0xff]
  %v366 = vld [vmem:[#allocation2 + $0xa8] sm:$0xff]
  %v367 = vld [vmem:[#allocation2 + $0xb0] sm:$0xff]
  %v368 = vld [vmem:[#allocation2 + $0xb8] sm:$0xff]
  %v369 = vld [vmem:[#allocation2 + $0xc0] sm:$0xff]
  %v370 = vld [vmem:[#allocation2 + $0xc8] sm:$0xff]
  %v371 = vld [vmem:[#allocation2 + $0xd0] sm:$0xff]
  %v372 = vld [vmem:[#allocation2 + $0xd8] sm:$0xff]
  %v373 = vld [vmem:[#allocation2 + $0xe0] sm:$0xff]
  %v374 = vld [vmem:[#allocation2 + $0xe8] sm:$0xff]
  %v375 = vld [vmem:[#allocation2 + $0xf0] sm:$0xff]
  %v376 = vld [vmem:[#allocation2 + $0xf8] sm:$0xff]
  %v377 = vld [vmem:[#allocation2 + $0x100] sm:$0xff]
  %v378 = vld [vmem:[#allocation2 + $0x108] sm:$0xff]
  %v379 = vld [vmem:[#allocation2 + $0x110] sm:$0xff]
  %vm380 = vcmask 654336
  %v382 = vsel %vm380, %v33, 0
  %384 = vmatprep.subr.bf16.mxu0 %v346
  %385 = vmatpush1.bf16.msra.mxu0 %v345
  %386 = vmatprep.subr.bf16.mxu0 %v353
  %387 = vmatpush1.bf16.msra.mxu0 %v352
  %388 = vmatprep.subr.bf16.mxu0 %v360
  %389 = vmatpush1.bf16.msra.mxu0 %v359
  %390 = vmatprep.subr.bf16.mxu0 %v367
  %391 = vmatpush1.bf16.msra.mxu0 %v366
  %392 = vmatprep.subr.bf16.mxu0 %v374
  %393 = vmatpush1.bf16.msra.mxu0 %v373
  %394 = vmatprep.subr.bf16.mxu0 0
  %395 = vmatpush1.bf16.msra.mxu0 0
  %396 = vmatprep.subr.bf16.mxu0 0
  %397 = vmatpush1.bf16.msra.mxu0 0
  %398 = vmatprep.subr.bf16.mxu0 0
  %399 = vmatpush1.bf16.msra.mxu0 0
  %400 = vmatprep.subr.bf16.mxu0 0
  %401 = vmatpush1.bf16.msra.mxu0 0
  %402 = vmatprep.subr.bf16.mxu0 0
  %403 = vmatpush1.bf16.msra.mxu0 0
  %404 = vmatprep.subr.bf16.mxu0 0
  %405 = vmatpush1.bf16.msra.mxu0 0
  %406 = vmatprep.subr.bf16.mxu0 0
  %407 = vmatpush1.bf16.msra.mxu0 0
  %408 = vmatprep.subr.bf16.mxu0 0
  %409 = vmatpush1.bf16.msra.mxu0 0
  %410 = vmatprep.subr.bf16.mxu0 0
  %411 = vmatpush1.bf16.msra.mxu0 0
  %412 = vmatprep.subr.bf16.mxu0 0
  %413 = vmatpush1.bf16.msra.mxu0 0
  %414 = vmatprep.subr.bf16.mxu0 0
  %415 = vmatpush1.bf16.msra.mxu0 0
  %416 = vmatprep.mubr.bf16.mxu0 0
  %417 = vmatmul.mubr.bf16.gmra.mrb[0].mxu0 %v382
  %v418 = vpop.f32.mrb[0].mxu0
  %v419 = vadd.f32 0.0, %v418
  %v420 = vpop.f32.mrb[0].mxu0
  %v421 = vadd.f32 0.0, %v420
  %v422 = vpop.f32.mrb[0].mxu0
  %v423 = vpop.f32.mrb[0].mxu0
  %424 = vdwg.mxu0
  %425 = vmatprep.subr.bf16.mxu0 %v348
  %426 = vmatpush1.bf16.msra.mxu0 %v347
  %427 = vmatprep.subr.bf16.mxu0 %v355
  %428 = vmatpush1.bf16.msra.mxu0 %v354
  %429 = vmatprep.subr.bf16.mxu0 %v362
  %430 = vmatpush1.bf16.msra.mxu0 %v361
  %431 = vmatprep.subr.bf16.mxu0 %v369
  %432 = vmatpush1.bf16.msra.mxu0 %v368
  %433 = vmatprep.subr.bf16.mxu0 %v376
  %434 = vmatpush1.bf16.msra.mxu0 %v375
  %435 = vmatprep.subr.bf16.mxu0 0
  %436 = vmatpush1.bf16.msra.mxu0 0
  %437 = vmatprep.subr.bf16.mxu0 0
  %438 = vmatpush1.bf16.msra.mxu0 0
  %439 = vmatprep.subr.bf16.mxu0 0
  %440 = vmatpush1.bf16.msra.mxu0 0
  %441 = vmatprep.subr.bf16.mxu0 0
  %442 = vmatpush1.bf16.msra.mxu0 0
  %443 = vmatprep.subr.bf16.mxu0 0
  %444 = vmatpush1.bf16.msra.mxu0 0
  %445 = vmatprep.subr.bf16.mxu0 0
  %446 = vmatpush1.bf16.msra.mxu0 0
  %447 = vmatprep.subr.bf16.mxu0 0
  %448 = vmatpush1.bf16.msra.mxu0 0
  %449 = vmatprep.subr.bf16.mxu0 0
  %450 = vmatpush1.bf16.msra.mxu0 0
  %451 = vmatprep.subr.bf16.mxu0 0
  %452 = vmatpush1.bf16.msra.mxu0 0
  %453 = vmatprep.subr.bf16.mxu0 0
  %454 = vmatpush1.bf16.msra.mxu0 0
  %455 = vmatprep.subr.bf16.mxu0 0
  %456 = vmatpush1.bf16.msra.mxu0 0
  %457 = vmatprep.mubr.bf16.mxu0 0
  %458 = vmatmul.mubr.bf16.gmra.mrb[0].mxu0 %v382
  %v459 = vpop.f32.mrb[0].mxu0
  %v460 = vadd.f32 0.0, %v459
  %v461 = vpop.f32.mrb[0].mxu0
  %v462 = vadd.f32 0.0, %v461
  %v463 = vpop.f32.mrb[0].mxu0
  %v464 = vpop.f32.mrb[0].mxu0
  %465 = vdwg.mxu0
  %466 = vmatprep.subr.bf16.mxu0 %v350
  %467 = vmatpush1.bf16.msra.mxu0 %v349
  %468 = vmatprep.subr.bf16.mxu0 %v357
  %469 = vmatpush1.bf16.msra.mxu0 %v356
  %470 = vmatprep.subr.bf16.mxu0 %v364
  %471 = vmatpush1.bf16.msra.mxu0 %v363
  %472 = vmatprep.subr.bf16.mxu0 %v371
  %473 = vmatpush1.bf16.msra.mxu0 %v370
  %474 = vmatprep.subr.bf16.mxu0 %v378
  %475 = vmatpush1.bf16.msra.mxu0 %v377
  %476 = vmatprep.subr.bf16.mxu0 0
  %477 = vmatpush1.bf16.msra.mxu0 0
  %478 = vmatprep.subr.bf16.mxu0 0
  %479 = vmatpush1.bf16.msra.mxu0 0
  %480 = vmatprep.subr.bf16.mxu0 0
  %481 = vmatpush1.bf16.msra.mxu0 0
  %482 = vmatprep.subr.bf16.mxu0 0
  %483 = vmatpush1.bf16.msra.mxu0 0
  %484 = vmatprep.subr.bf16.mxu0 0
  %485 = vmatpush1.bf16.msra.mxu0 0
  %486 = vmatprep.subr.bf16.mxu0 0
  %487 = vmatpush1.bf16.msra.mxu0 0
  %488 = vmatprep.subr.bf16.mxu0 0
  %489 = vmatpush1.bf16.msra.mxu0 0
  %490 = vmatprep.subr.bf16.mxu0 0
  %491 = vmatpush1.bf16.msra.mxu0 0
  %492 = vmatprep.subr.bf16.mxu0 0
  %493 = vmatpush1.bf16.msra.mxu0 0
  %494 = vmatprep.subr.bf16.mxu0 0
  %495 = vmatpush1.bf16.msra.mxu0 0
  %496 = vmatprep.subr.bf16.mxu0 0
  %497 = vmatpush1.bf16.msra.mxu0 0
  %498 = vmatprep.mubr.bf16.mxu0 0
  %499 = vmatmul.mubr.bf16.gmra.mrb[0].mxu0 %v382
  %v500 = vpop.f32.mrb[0].mxu0
  %v501 = vadd.f32 0.0, %v500
  %v502 = vpop.f32.mrb[0].mxu0
  %v503 = vadd.f32 0.0, %v502
  %v504 = vpop.f32.mrb[0].mxu0
  %v505 = vpop.f32.mrb[0].mxu0
  %506 = vdwg.mxu0
  %507 = vmatprep.subr.bf16.mxu0 0
  %508 = vmatpush1.bf16.msra.mxu0 %v351
  %509 = vmatprep.subr.bf16.mxu0 0
  %510 = vmatpush1.bf16.msra.mxu0 %v358
  %511 = vmatprep.subr.bf16.mxu0 0
  %512 = vmatpush1.bf16.msra.mxu0 %v365
  %513 = vmatprep.subr.bf16.mxu0 0
  %514 = vmatpush1.bf16.msra.mxu0 %v372
  %515 = vmatprep.subr.bf16.mxu0 0
  %516 = vmatpush1.bf16.msra.mxu0 %v379
  %517 = vmatprep.subr.bf16.mxu0 0
  %518 = vmatpush1.bf16.msra.mxu0 0
  %519 = vmatprep.subr.bf16.mxu0 0
  %520 = vmatpush1.bf16.msra.mxu0 0
  %521 = vmatprep.subr.bf16.mxu0 0
  %522 = vmatpush1.bf16.msra.mxu0 0
  %523 = vmatprep.subr.bf16.mxu0 0
  %524 = vmatpush1.bf16.msra.mxu0 0
  %525 = vmatprep.subr.bf16.mxu0 0
  %526 = vmatpush1.bf16.msra.mxu0 0
  %527 = vmatprep.subr.bf16.mxu0 0
  %528 = vmatpush1.bf16.msra.mxu0 0
  %529 = vmatprep.subr.bf16.mxu0 0
  %530 = vmatpush1.bf16.msra.mxu0 0
  %531 = vmatprep.subr.bf16.mxu0 0
  %532 = vmatpush1.bf16.msra.mxu0 0
  %533 = vmatprep.subr.bf16.mxu0 0
  %534 = vmatpush1.bf16.msra.mxu0 0
  %535 = vmatprep.subr.bf16.mxu0 0
  %536 = vmatpush1.bf16.msra.mxu0 0
  %537 = vmatprep.subr.bf16.mxu0 0
  %538 = vmatpush1.bf16.msra.mxu0 0
  %539 = vmatprep.mubr.bf16.mxu0 0
  %540 = vmatmul.mubr.bf16.gmra.mrb[0].mxu0 %v382
  %v541 = vpop.f32.mrb[0].mxu0
  %v542 = vadd.f32 0.0, %v541
  %v543 = vpop.f32.mrb[0].mxu0
  %v544 = vpop.f32.mrb[0].mxu0
  %v545 = vpop.f32.mrb[0].mxu0
  %546 = vdwg.mxu0
  %v547 = vmax.f32 %v419, 0.0
  %v548 = vmax.f32 %v421, 0.0
  %v549 = vmax.f32 %v460, 0.0
  %v550 = vmax.f32 %v462, 0.0
  %v551 = vmax.f32 %v501, 0.0
  %v552 = vmax.f32 %v503, 0.0
  %v553 = vmax.f32 %v542, 0.0
  %v554 = vld [vmem:[%s3] sm:$0x7f]
  %v556 = vlaneseq
  %v557 = vshrl.u32 %v556, 7
  %v558 = vsub.s32 0, %v557
  %v559 = vrot.slane %v554, %v558
  %v560 = vlaneseq
  %v561 = vshrl.u32 %v560, 7
  %v562 = vsub.s32 1, %v561
  %v563 = vrot.slane %v554, %v562
  %v564 = vlaneseq
  %v565 = vshrl.u32 %v564, 7
  %v566 = vsub.s32 2, %v565
  %v567 = vrot.slane %v554, %v566
  %v568 = vlaneseq
  %v569 = vshrl.u32 %v568, 7
  %v570 = vsub.s32 3, %v569
  %v571 = vrot.slane %v554, %v570
  %v572 = vlaneseq
  %v573 = vshrl.u32 %v572, 7
  %v574 = vsub.s32 4, %v573
  %v575 = vrot.slane %v554, %v574
  %v576 = vlaneseq
  %v577 = vshrl.u32 %v576, 7
  %v578 = vsub.s32 5, %v577
  %v579 = vrot.slane %v554, %v578
  %v580 = vlaneseq
  %v581 = vshrl.u32 %v580, 7
  %v582 = vsub.s32 6, %v581
  %v583 = vrot.slane %v554, %v582
  %v591 = vmul.f32 %v547, %v559
  %v592 = vmul.f32 %v548, %v563
  %v593 = vmul.f32 %v549, %v567
  %v594 = vmul.f32 %v550, %v571
  %v595 = vmul.f32 %v551, %v575
  %v596 = vmul.f32 %v552, %v579
  %v597 = vmul.f32 %v553, %v583
  %605 = vrot.lane.b32.xlu0 %v591, 42
  %v606 = vpop.permute.xlu0 %605
  %607 = vrot.lane.b32.xlu0 %v592, 42
  %v608 = vpop.permute.xlu0 %607
  %609 = vrot.lane.b32.xlu0 %v593, 42
  %v610 = vpop.permute.xlu0 %609
  %611 = vrot.lane.b32.xlu0 %v594, 42
  %v612 = vpop.permute.xlu0 %611
  %613 = vrot.lane.b32.xlu0 %v595, 42
  %v614 = vpop.permute.xlu0 %613
  %615 = vrot.lane.b32.xlu0 %v596, 42
  %v616 = vpop.permute.xlu0 %615
  %617 = vrot.lane.b32.xlu0 %v597, 42
  %v618 = vpop.permute.xlu0 %617
  %v619 = vsel %vm57, %v606, %v608
  %v620 = vsel %vm57, %v608, %v610
  %v621 = vsel %vm57, %v610, %v612
  %v622 = vsel %vm57, %v612, %v614
  %v623 = vsel %vm57, %v614, %v616
  %v624 = vsel %vm57, %v616, %v618
  %v632 = vpack.c.bf16 %v606, %v18
  %v633 = vpack.c.bf16 %v619, %v19
  %v634 = vpack.c.bf16 %v620, %v20
  %v635 = vpack.c.bf16 %v621, %v21
  %v636 = vpack.c.bf16 %v622, %v22
  %v637 = vpack.c.bf16 %v623, %v23
  %v638 = vpack.c.bf16 %v624, %v24
  %646 = vrot.lane.b32.xlu0 %v632, 86
  %v647 = vpop.permute.xlu0 %646
  %648 = vrot.lane.b32.xlu0 %v633, 86
  %v649 = vpop.permute.xlu0 %648
  %650 = vrot.lane.b32.xlu0 %v634, 86
  %v651 = vpop.permute.xlu0 %650
  %652 = vrot.lane.b32.xlu0 %v635, 86
  %v653 = vpop.permute.xlu0 %652
  %654 = vrot.lane.b32.xlu0 %v636, 86
  %v655 = vpop.permute.xlu0 %654
  %656 = vrot.lane.b32.xlu0 %v637, 86
  %v657 = vpop.permute.xlu0 %656
  %658 = vrot.lane.b32.xlu0 %v638, 86
  %v659 = vpop.permute.xlu0 %658
  %v660 = vsel %vm99, %v647, %v649
  %v661 = vsel %vm99, %v649, %v651
  %v662 = vsel %vm99, %v651, %v653
  %v663 = vsel %vm99, %v653, %v655
  %v664 = vsel %vm99, %v655, %v657
  %v665 = vsel %vm99, %v657, %v659
  %673 = vst [vmem:[#allocation2] sm:$0xff] %v660
  %674 = vst [vmem:[#allocation2 + $0x8] sm:$0xff] %v661
  %675 = vst [vmem:[#allocation2 + $0x10] sm:$0xff] %v662
  %676 = vst [vmem:[#allocation2 + $0x18] sm:$0xff] %v663
  %677 = vst [vmem:[#allocation2 + $0x20] sm:$0xff] %v664
  %678 = vst [vmem:[#allocation2 + $0x28] sm:$0xff] %v665
  %vm679 = vcmask 261120
  %680 = vst.msk [vmem:[#allocation2 + $0x30] sm:$0xff] %vm679, %v659
  %681 = vrot.lane.b32.xlu0 %v591, 127
  %v682 = vpop.permute.xlu0 %681
  %683 = vrot.lane.b32.xlu0 %v592, 127
  %v684 = vpop.permute.xlu0 %683
  %685 = vrot.lane.b32.xlu0 %v593, 127
  %v686 = vpop.permute.xlu0 %685
  %687 = vrot.lane.b32.xlu0 %v594, 127
  %v688 = vpop.permute.xlu0 %687
  %689 = vrot.lane.b32.xlu0 %v595, 127
  %v690 = vpop.permute.xlu0 %689
  %691 = vrot.lane.b32.xlu0 %v596, 127
  %v692 = vpop.permute.xlu0 %691
  %693 = vrot.lane.b32.xlu0 %v597, 127
  %v694 = vpop.permute.xlu0 %693
  %v695 = vsel %vm135, %v682, %v684
  %v696 = vsel %vm135, %v684, %v686
  %v697 = vsel %vm135, %v686, %v688
  %v698 = vsel %vm135, %v688, %v690
  %v699 = vsel %vm135, %v690, %v692
  %v700 = vsel %vm135, %v692, %v694
  %v708 = vpack.c.bf16 %v695, %v591
  %v709 = vpack.c.bf16 %v696, %v592
  %v710 = vpack.c.bf16 %v697, %v593
  %v711 = vpack.c.bf16 %v698, %v594
  %v712 = vpack.c.bf16 %v699, %v595
  %v713 = vpack.c.bf16 %v700, %v596
  %v714 = vpack.c.bf16 %v694, %v597
  %722 = vrot.lane.b32.xlu0 %v708, 127
  %v723 = vpop.permute.xlu0 %722
  %724 = vrot.lane.b32.xlu0 %v709, 127
  %v725 = vpop.permute.xlu0 %724
  %726 = vrot.lane.b32.xlu0 %v710, 127
  %v727 = vpop.permute.xlu0 %726
  %728 = vrot.lane.b32.xlu0 %v711, 127
  %v729 = vpop.permute.xlu0 %728
  %730 = vrot.lane.b32.xlu0 %v712, 127
  %v731 = vpop.permute.xlu0 %730
  %732 = vrot.lane.b32.xlu0 %v713, 127
  %v733 = vpop.permute.xlu0 %732
  %734 = vrot.lane.b32.xlu0 %v714, 127
  %v735 = vpop.permute.xlu0 %734
  %v736 = vsel %vm177, %v723, %v725
  %v737 = vsel %vm177, %v725, %v727
  %v738 = vsel %vm177, %v727, %v729
  %v739 = vsel %vm177, %v729, %v731
  %v740 = vsel %vm177, %v731, %v733
  %v741 = vsel %vm177, %v733, %v735
  %749 = vst [vmem:[#allocation2 + $0x38] sm:$0xff] %v736
  %750 = vst [vmem:[#allocation2 + $0x40] sm:$0xff] %v737
  %751 = vst [vmem:[#allocation2 + $0x48] sm:$0xff] %v738
  %752 = vst [vmem:[#allocation2 + $0x50] sm:$0xff] %v739
  %753 = vst [vmem:[#allocation2 + $0x58] sm:$0xff] %v740
  %754 = vst [vmem:[#allocation2 + $0x60] sm:$0xff] %v741
  %755 = vst.msk [vmem:[#allocation2 + $0x68] sm:$0xff] %vm679, %v735
  %756 = vrot.lane.b32.xlu0 %v708, 108
  %v757 = vpop.permute.xlu0 %756
  %758 = vrot.lane.b32.xlu0 %v709, 108
  %v759 = vpop.permute.xlu0 %758
  %760 = vrot.lane.b32.xlu0 %v710, 108
  %v761 = vpop.permute.xlu0 %760
  %762 = vrot.lane.b32.xlu0 %v711, 108
  %v763 = vpop.permute.xlu0 %762
  %764 = vrot.lane.b32.xlu0 %v712, 108
  %v765 = vpop.permute.xlu0 %764
  %766 = vrot.lane.b32.xlu0 %v713, 108
  %v767 = vpop.permute.xlu0 %766
  %768 = vrot.lane.b32.xlu0 %v714, 108
  %v769 = vpop.permute.xlu0 %768
  %v770 = vsel %vm212, %v757, %v759
  %v771 = vsel %vm212, %v759, %v761
  %v772 = vsel %vm212, %v761, %v763
  %v773 = vsel %vm212, %v763, %v765
  %v774 = vsel %vm212, %v765, %v767
  %v775 = vsel %vm212, %v767, %v769
  %783 = vst [vmem:[#allocation2 + $0x70] sm:$0xff] %v770
  %784 = vst [vmem:[#allocation2 + $0x78] sm:$0xff] %v771
  %785 = vst [vmem:[#allocation2 + $0x80] sm:$0xff] %v772
  %786 = vst [vmem:[#allocation2 + $0x88] sm:$0xff] %v773
  %787 = vst [vmem:[#allocation2 + $0x90] sm:$0xff] %v774
  %788 = vst [vmem:[#allocation2 + $0x98] sm:$0xff] %v775
  %789 = vst.msk [vmem:[#allocation2 + $0xa0] sm:$0xff] %vm679, %v769
  %790 = vrot.lane.b32.xlu0 %v591, 110
  %v791 = vpop.permute.xlu0 %790
  %792 = vrot.lane.b32.xlu0 %v592, 110
  %v793 = vpop.permute.xlu0 %792
  %794 = vrot.lane.b32.xlu0 %v593, 110
  %v795 = vpop.permute.xlu0 %794
  %796 = vrot.lane.b32.xlu0 %v594, 110
  %v797 = vpop.permute.xlu0 %796
  %798 = vrot.lane.b32.xlu0 %v595, 110
  %v799 = vpop.permute.xlu0 %798
  %800 = vrot.lane.b32.xlu0 %v596, 110
  %v801 = vpop.permute.xlu0 %800
  %802 = vrot.lane.b32.xlu0 %v597, 110
  %v803 = vpop.permute.xlu0 %802
  %v804 = vsel %vm247, %v791, %v793
  %v805 = vsel %vm247, %v793, %v795
  %v806 = vsel %vm247, %v795, %v797
  %v807 = vsel %vm247, %v797, %v799
  %v808 = vsel %vm247, %v799, %v801
  %v809 = vsel %vm247, %v801, %v803
  %v817 = vpack.c.bf16 %v804, %v591
  %v818 = vpack.c.bf16 %v805, %v592
  %v819 = vpack.c.bf16 %v806, %v593
  %v820 = vpack.c.bf16 %v807, %v594
  %v821 = vpack.c.bf16 %v808, %v595
  %v822 = vpack.c.bf16 %v809, %v596
  %v823 = vpack.c.bf16 %v803, %v597
  %831 = vrot.lane.b32.xlu0 %v817, 106
  %v832 = vpop.permute.xlu0 %831
  %833 = vrot.lane.b32.xlu0 %v818, 106
  %v834 = vpop.permute.xlu0 %833
  %835 = vrot.lane.b32.xlu0 %v819, 106
  %v836 = vpop.permute.xlu0 %835
  %837 = vrot.lane.b32.xlu0 %v820, 106
  %v838 = vpop.permute.xlu0 %837
  %839 = vrot.lane.b32.xlu0 %v821, 106
  %v840 = vpop.permute.xlu0 %839
  %841 = vrot.lane.b32.xlu0 %v822, 106
  %v842 = vpop.permute.xlu0 %841
  %843 = vrot.lane.b32.xlu0 %v823, 106
  %v844 = vpop.permute.xlu0 %843
  %v845 = vsel %vm289, %v832, %v834
  %v846 = vsel %vm289, %v834, %v836
  %v847 = vsel %vm289, %v836, %v838
  %v848 = vsel %vm289, %v838, %v840
  %v849 = vsel %vm289, %v840, %v842
  %v850 = vsel %vm289, %v842, %v844
  %858 = vst [vmem:[#allocation2 + $0xa8] sm:$0xff] %v845
  %859 = vst [vmem:[#allocation2 + $0xb0] sm:$0xff] %v846
  %860 = vst [vmem:[#allocation2 + $0xb8] sm:$0xff] %v847
  %861 = vst [vmem:[#allocation2 + $0xc0] sm:$0xff] %v848
  %862 = vst [vmem:[#allocation2 + $0xc8] sm:$0xff] %v849
  %863 = vst [vmem:[#allocation2 + $0xd0] sm:$0xff] %v850
  %864 = vst.msk [vmem:[#allocation2 + $0xd8] sm:$0xff] %vm679, %v844
  %865 = vrot.lane.b32.xlu0 %v708, 87
  %v866 = vpop.permute.xlu0 %865
  %867 = vrot.lane.b32.xlu0 %v709, 87
  %v868 = vpop.permute.xlu0 %867
  %869 = vrot.lane.b32.xlu0 %v710, 87
  %v870 = vpop.permute.xlu0 %869
  %871 = vrot.lane.b32.xlu0 %v711, 87
  %v872 = vpop.permute.xlu0 %871
  %873 = vrot.lane.b32.xlu0 %v712, 87
  %v874 = vpop.permute.xlu0 %873
  %875 = vrot.lane.b32.xlu0 %v713, 87
  %v876 = vpop.permute.xlu0 %875
  %877 = vrot.lane.b32.xlu0 %v714, 87
  %v878 = vpop.permute.xlu0 %877
  %v879 = vsel %vm324, %v866, %v868
  %v880 = vsel %vm324, %v868, %v870
  %v881 = vsel %vm324, %v870, %v872
  %v882 = vsel %vm324, %v872, %v874
  %v883 = vsel %vm324, %v874, %v876
  %v884 = vsel %vm324, %v876, %v878
  %892 = vst [vmem:[#allocation2 + $0xe0] sm:$0xff] %v879
  %893 = vst [vmem:[#allocation2 + $0xe8] sm:$0xff] %v880
  %894 = vst [vmem:[#allocation2 + $0xf0] sm:$0xff] %v881
  %895 = vst [vmem:[#allocation2 + $0xf8] sm:$0xff] %v882
  %896 = vst [vmem:[#allocation2 + $0x100] sm:$0xff] %v883
  %897 = vst [vmem:[#allocation2 + $0x108] sm:$0xff] %v884
  %898 = vst.msk [vmem:[#allocation2 + $0x110] sm:$0xff] %vm679, %v878
  %v899 = vld [vmem:[#allocation2] sm:$0xff]
  %v900 = vld [vmem:[#allocation2 + $0x8] sm:$0xff]
  %v901 = vld [vmem:[#allocation2 + $0x10] sm:$0xff]
  %v902 = vld [vmem:[#allocation2 + $0x18] sm:$0xff]
  %v903 = vld [vmem:[#allocation2 + $0x20] sm:$0xff]
  %v904 = vld [vmem:[#allocation2 + $0x28] sm:$0xff]
  %v905 = vld [vmem:[#allocation2 + $0x30] sm:$0xff]
  %v906 = vld [vmem:[#allocation2 + $0x38] sm:$0xff]
  %v907 = vld [vmem:[#allocation2 + $0x40] sm:$0xff]
  %v908 = vld [vmem:[#allocation2 + $0x48] sm:$0xff]
  %v909 = vld [vmem:[#allocation2 + $0x50] sm:$0xff]
  %v910 = vld [vmem:[#allocation2 + $0x58] sm:$0xff]
  %v911 = vld [vmem:[#allocation2 + $0x60] sm:$0xff]
  %v912 = vld [vmem:[#allocation2 + $0x68] sm:$0xff]
  %v913 = vld [vmem:[#allocation2 + $0x70] sm:$0xff]
  %v914 = vld [vmem:[#allocation2 + $0x78] sm:$0xff]
  %v915 = vld [vmem:[#allocation2 + $0x80] sm:$0xff]
  %v916 = vld [vmem:[#allocation2 + $0x88] sm:$0xff]
  %v917 = vld [vmem:[#allocation2 + $0x90] sm:$0xff]
  %v918 = vld [vmem:[#allocation2 + $0x98] sm:$0xff]
  %v919 = vld [vmem:[#allocation2 + $0xa0] sm:$0xff]
  %v920 = vld [vmem:[#allocation2 + $0xa8] sm:$0xff]
  %v921 = vld [vmem:[#allocation2 + $0xb0] sm:$0xff]
  %v922 = vld [vmem:[#allocation2 + $0xb8] sm:$0xff]
  %v923 = vld [vmem:[#allocation2 + $0xc0] sm:$0xff]
  %v924 = vld [vmem:[#allocation2 + $0xc8] sm:$0xff]
  %v925 = vld [vmem:[#allocation2 + $0xd0] sm:$0xff]
  %v926 = vld [vmem:[#allocation2 + $0xd8] sm:$0xff]
  %v927 = vld [vmem:[#allocation2 + $0xe0] sm:$0xff]
  %v928 = vld [vmem:[#allocation2 + $0xe8] sm:$0xff]
  %v929 = vld [vmem:[#allocation2 + $0xf0] sm:$0xff]
  %v930 = vld [vmem:[#allocation2 + $0xf8] sm:$0xff]
  %v931 = vld [vmem:[#allocation2 + $0x100] sm:$0xff]
  %v932 = vld [vmem:[#allocation2 + $0x108] sm:$0xff]
  %v933 = vld [vmem:[#allocation2 + $0x110] sm:$0xff]
  %v935 = vsel %vm380, %v35, 0
  %937 = vmatprep.subr.bf16.mxu0 %v900
  %938 = vmatpush1.bf16.msra.mxu0 %v899
  %939 = vmatprep.subr.bf16.mxu0 %v907
  %940 = vmatpush1.bf16.msra.mxu0 %v906
  %941 = vmatprep.subr.bf16.mxu0 %v914
  %942 = vmatpush1.bf16.msra.mxu0 %v913
  %943 = vmatprep.subr.bf16.mxu0 %v921
  %944 = vmatpush1.bf16.msra.mxu0 %v920
  %945 = vmatprep.subr.bf16.mxu0 %v928
  %946 = vmatpush1.bf16.msra.mxu0 %v927
  %947 = vmatprep.subr.bf16.mxu0 0
  %948 = vmatpush1.bf16.msra.mxu0 0
  %949 = vmatprep.subr.bf16.mxu0 0
  %950 = vmatpush1.bf16.msra.mxu0 0
  %951 = vmatprep.subr.bf16.mxu0 0
  %952 = vmatpush1.bf16.msra.mxu0 0
  %953 = vmatprep.subr.bf16.mxu0 0
  %954 = vmatpush1.bf16.msra.mxu0 0
  %955 = vmatprep.subr.bf16.mxu0 0
  %956 = vmatpush1.bf16.msra.mxu0 0
  %957 = vmatprep.subr.bf16.mxu0 0
  %958 = vmatpush1.bf16.msra.mxu0 0
  %959 = vmatprep.subr.bf16.mxu0 0
  %960 = vmatpush1.bf16.msra.mxu0 0
  %961 = vmatprep.subr.bf16.mxu0 0
  %962 = vmatpush1.bf16.msra.mxu0 0
  %963 = vmatprep.subr.bf16.mxu0 0
  %964 = vmatpush1.bf16.msra.mxu0 0
  %965 = vmatprep.subr.bf16.mxu0 0
  %966 = vmatpush1.bf16.msra.mxu0 0
  %967 = vmatprep.subr.bf16.mxu0 0
  %968 = vmatpush1.bf16.msra.mxu0 0
  %969 = vmatprep.mubr.bf16.mxu0 0
  %970 = vmatmul.mubr.bf16.gmra.mrb[0].mxu0 %v935
  %v971 = vpop.f32.mrb[0].mxu0
  %v972 = vadd.f32 0.0, %v971
  %v973 = vpop.f32.mrb[0].mxu0
  %v974 = vadd.f32 0.0, %v973
  %v975 = vpop.f32.mrb[0].mxu0
  %v976 = vpop.f32.mrb[0].mxu0
  %977 = vdwg.mxu0
  %978 = vmatprep.subr.bf16.mxu0 %v902
  %979 = vmatpush1.bf16.msra.mxu0 %v901
  %980 = vmatprep.subr.bf16.mxu0 %v909
  %981 = vmatpush1.bf16.msra.mxu0 %v908
  %982 = vmatprep.subr.bf16.mxu0 %v916
  %983 = vmatpush1.bf16.msra.mxu0 %v915
  %984 = vmatprep.subr.bf16.mxu0 %v923
  %985 = vmatpush1.bf16.msra.mxu0 %v922
  %986 = vmatprep.subr.bf16.mxu0 %v930
  %987 = vmatpush1.bf16.msra.mxu0 %v929
  %988 = vmatprep.subr.bf16.mxu0 0
  %989 = vmatpush1.bf16.msra.mxu0 0
  %990 = vmatprep.subr.bf16.mxu0 0
  %991 = vmatpush1.bf16.msra.mxu0 0
  %992 = vmatprep.subr.bf16.mxu0 0
  %993 = vmatpush1.bf16.msra.mxu0 0
  %994 = vmatprep.subr.bf16.mxu0 0
  %995 = vmatpush1.bf16.msra.mxu0 0
  %996 = vmatprep.subr.bf16.mxu0 0
  %997 = vmatpush1.bf16.msra.mxu0 0
  %998 = vmatprep.subr.bf16.mxu0 0
  %999 = vmatpush1.bf16.msra.mxu0 0
  %1000 = vmatprep.subr.bf16.mxu0 0
  %1001 = vmatpush1.bf16.msra.mxu0 0
  %1002 = vmatprep.subr.bf16.mxu0 0
  %1003 = vmatpush1.bf16.msra.mxu0 0
  %1004 = vmatprep.subr.bf16.mxu0 0
  %1005 = vmatpush1.bf16.msra.mxu0 0
  %1006 = vmatprep.subr.bf16.mxu0 0
  %1007 = vmatpush1.bf16.msra.mxu0 0
  %1008 = vmatprep.subr.bf16.mxu0 0
  %1009 = vmatpush1.bf16.msra.mxu0 0
  %1010 = vmatprep.mubr.bf16.mxu0 0
  %1011 = vmatmul.mubr.bf16.gmra.mrb[0].mxu0 %v935
  %v1012 = vpop.f32.mrb[0].mxu0
  %v1013 = vadd.f32 0.0, %v1012
  %v1014 = vpop.f32.mrb[0].mxu0
  %v1015 = vadd.f32 0.0, %v1014
  %v1016 = vpop.f32.mrb[0].mxu0
  %v1017 = vpop.f32.mrb[0].mxu0
  %1018 = vdwg.mxu0
  %1019 = vmatprep.subr.bf16.mxu0 %v904
  %1020 = vmatpush1.bf16.msra.mxu0 %v903
  %1021 = vmatprep.subr.bf16.mxu0 %v911
  %1022 = vmatpush1.bf16.msra.mxu0 %v910
  %1023 = vmatprep.subr.bf16.mxu0 %v918
  %1024 = vmatpush1.bf16.msra.mxu0 %v917
  %1025 = vmatprep.subr.bf16.mxu0 %v925
  %1026 = vmatpush1.bf16.msra.mxu0 %v924
  %1027 = vmatprep.subr.bf16.mxu0 %v932
  %1028 = vmatpush1.bf16.msra.mxu0 %v931
  %1029 = vmatprep.subr.bf16.mxu0 0
  %1030 = vmatpush1.bf16.msra.mxu0 0
  %1031 = vmatprep.subr.bf16.mxu0 0
  %1032 = vmatpush1.bf16.msra.mxu0 0
  %1033 = vmatprep.subr.bf16.mxu0 0
  %1034 = vmatpush1.bf16.msra.mxu0 0
  %1035 = vmatprep.subr.bf16.mxu0 0
  %1036 = vmatpush1.bf16.msra.mxu0 0
  %1037 = vmatprep.subr.bf16.mxu0 0
  %1038 = vmatpush1.bf16.msra.mxu0 0
  %1039 = vmatprep.subr.bf16.mxu0 0
  %1040 = vmatpush1.bf16.msra.mxu0 0
  %1041 = vmatprep.subr.bf16.mxu0 0
  %1042 = vmatpush1.bf16.msra.mxu0 0
  %1043 = vmatprep.subr.bf16.mxu0 0
  %1044 = vmatpush1.bf16.msra.mxu0 0
  %1045 = vmatprep.subr.bf16.mxu0 0
  %1046 = vmatpush1.bf16.msra.mxu0 0
  %1047 = vmatprep.subr.bf16.mxu0 0
  %1048 = vmatpush1.bf16.msra.mxu0 0
  %1049 = vmatprep.subr.bf16.mxu0 0
  %1050 = vmatpush1.bf16.msra.mxu0 0
  %1051 = vmatprep.mubr.bf16.mxu0 0
  %1052 = vmatmul.mubr.bf16.gmra.mrb[0].mxu0 %v935
  %v1053 = vpop.f32.mrb[0].mxu0
  %v1054 = vadd.f32 0.0, %v1053
  %v1055 = vpop.f32.mrb[0].mxu0
  %v1056 = vadd.f32 0.0, %v1055
  %v1057 = vpop.f32.mrb[0].mxu0
  %v1058 = vpop.f32.mrb[0].mxu0
  %1059 = vdwg.mxu0
  %1060 = vmatprep.subr.bf16.mxu0 0
  %1061 = vmatpush1.bf16.msra.mxu0 %v905
  %1062 = vmatprep.subr.bf16.mxu0 0
  %1063 = vmatpush1.bf16.msra.mxu0 %v912
  %1064 = vmatprep.subr.bf16.mxu0 0
  %1065 = vmatpush1.bf16.msra.mxu0 %v919
  %1066 = vmatprep.subr.bf16.mxu0 0
  %1067 = vmatpush1.bf16.msra.mxu0 %v926
  %1068 = vmatprep.subr.bf16.mxu0 0
  %1069 = vmatpush1.bf16.msra.mxu0 %v933
  %1070 = vmatprep.subr.bf16.mxu0 0
  %1071 = vmatpush1.bf16.msra.mxu0 0
  %1072 = vmatprep.subr.bf16.mxu0 0
  %1073 = vmatpush1.bf16.msra.mxu0 0
  %1074 = vmatprep.subr.bf16.mxu0 0
  %1075 = vmatpush1.bf16.msra.mxu0 0
  %1076 = vmatprep.subr.bf16.mxu0 0
  %1077 = vmatpush1.bf16.msra.mxu0 0
  %1078 = vmatprep.subr.bf16.mxu0 0
  %1079 = vmatpush1.bf16.msra.mxu0 0
  %1080 = vmatprep.subr.bf16.mxu0 0
  %1081 = vmatpush1.bf16.msra.mxu0 0
  %1082 = vmatprep.subr.bf16.mxu0 0
  %1083 = vmatpush1.bf16.msra.mxu0 0
  %1084 = vmatprep.subr.bf16.mxu0 0
  %1085 = vmatpush1.bf16.msra.mxu0 0
  %1086 = vmatprep.subr.bf16.mxu0 0
  %1087 = vmatpush1.bf16.msra.mxu0 0
  %1088 = vmatprep.subr.bf16.mxu0 0
  %1089 = vmatpush1.bf16.msra.mxu0 0
  %1090 = vmatprep.subr.bf16.mxu0 0
  %1091 = vmatpush1.bf16.msra.mxu0 0
  %1092 = vmatprep.mubr.bf16.mxu0 0
  %1093 = vmatmul.mubr.bf16.gmra.mrb[0].mxu0 %v935
  %v1094 = vpop.f32.mrb[0].mxu0
  %v1095 = vadd.f32 0.0, %v1094
  %v1096 = vpop.f32.mrb[0].mxu0
  %v1097 = vpop.f32.mrb[0].mxu0
  %v1098 = vpop.f32.mrb[0].mxu0
  %1099 = vdwg.mxu0
  %v1100 = vpack.c.bf16 %v972, %v972
  %v1101 = vpack.c.bf16 %v974, %v974
  %v1102 = vpack.c.bf16 %v1013, %v1013
  %v1103 = vpack.c.bf16 %v1015, %v1015
  %v1104 = vpack.c.bf16 %v1054, %v1054
  %v1105 = vpack.c.bf16 %v1056, %v1056
  %v1106 = vpack.c.bf16 %v1095, %v1095
  %v1107 = vld [vmem:[%s2] sm:$0xf]
  %v1108 = vld [vmem:[%s2 + $0x4] sm:$0xf]
  %v1109 = vld [vmem:[%s2 + $0x8] sm:$0xf]
  %v1110 = vld [vmem:[%s2 + $0xc] sm:$0xf]
  %v1111 = vld [vmem:[%s2 + $0x10] sm:$0xf]
  %v1112 = vld [vmem:[%s2 + $0x14] sm:$0xf]
  %v1113 = vld [vmem:[%s2 + $0x18] sm:$0xf]
  %v1114 = vld [vmem:[%s2 + $0x1c] sm:$0xf]
  %v1115 = vld [vmem:[%s2 + $0x20] sm:$0xf]
  %v1116 = vld [vmem:[%s2 + $0x24] sm:$0xf]
  %v1117 = vld [vmem:[%s2 + $0x28] sm:$0xf]
  %v1118 = vld [vmem:[%s2 + $0x2c] sm:$0xf]
  %v1119 = vld [vmem:[%s2 + $0x30] sm:$0xf]
  %v1120 = vld [vmem:[%s2 + $0x34] sm:$0xf]
  %v1121 = vld [vmem:[%s2 + $0x38] sm:$0xf]
  %v1122 = vld [vmem:[%s2 + $0x3c] sm:$0xf]
  %v1123 = vld [vmem:[%s2 + $0x40] sm:$0xf]
  %v1124 = vld [vmem:[%s2 + $0x44] sm:$0xf]
  %v1125 = vld [vmem:[%s2 + $0x48] sm:$0xf]
  %v1126 = vld [vmem:[%s2 + $0x4c] sm:$0xf]
  %v1127 = vld [vmem:[%s2 + $0x50] sm:$0xf]
  %v1128 = vld [vmem:[%s2 + $0x54] sm:$0xf]
  %v1129 = vld [vmem:[%s2 + $0x58] sm:$0xf]
  %v1130 = vld [vmem:[%s2 + $0x5c] sm:$0xf]
  %v1131 = vld [vmem:[%s2 + $0x60] sm:$0xf]
  %v1132 = vld [vmem:[%s2 + $0x64] sm:$0xf]
  %v1133 = vld [vmem:[%s2 + $0x68] sm:$0xf]
  %v1134 = vld [vmem:[%s2 + $0x6c] sm:$0xf]
  %v1135 = vld [vmem:[%s2 + $0x70] sm:$0xf]
  %v1136 = vld [vmem:[%s2 + $0x74] sm:$0xf]
  %v1137 = vld [vmem:[%s2 + $0x78] sm:$0xf]
  %v1138 = vld [vmem:[%s2 + $0x7c] sm:$0xf]
  %v1139 = vld [vmem:[%s2 + $0x80] sm:$0xf]
  %v1140 = vld [vmem:[%s2 + $0x84] sm:$0xf]
  %v1141 = vld [vmem:[%s2 + $0x88] sm:$0xf]
  %v1142 = vld [vmem:[%s2 + $0x8c] sm:$0xf]
  %v1143 = vld [vmem:[%s2 + $0x90] sm:$0xf]
  %v1144 = vld [vmem:[%s2 + $0x94] sm:$0xf]
  %v1145 = vld [vmem:[%s2 + $0x98] sm:$0xf]
  %v1146 = vld [vmem:[%s2 + $0x9c] sm:$0xf]
  %v1147 = vld [vmem:[%s2 + $0xa0] sm:$0xf]
  %v1148 = vld [vmem:[%s2 + $0xa4] sm:$0xf]
  %v1149 = vld [vmem:[%s2 + $0xa8] sm:$0xf]
  %v1150 = vld [vmem:[%s2 + $0xac] sm:$0xf]
  %v1151 = vld [vmem:[%s2 + $0xb0] sm:$0xf]
  %v1152 = vld [vmem:[%s2 + $0xb4] sm:$0xf]
  %v1153 = vld [vmem:[%s2 + $0xb8] sm:$0xf]
  %v1154 = vld [vmem:[%s2 + $0xbc] sm:$0xf]
  %v1155 = vld [vmem:[%s2 + $0xc0] sm:$0xf]
  %v1156 = vld [vmem:[%s2 + $0xc4] sm:$0xf]
  %v1157 = vld [vmem:[%s2 + $0xc8] sm:$0xf]
  %v1158 = vld [vmem:[%s2 + $0xcc] sm:$0xf]
  %v1159 = vld [vmem:[%s2 + $0xd0] sm:$0xf]
  %v1160 = vld [vmem:[%s2 + $0xd4] sm:$0xf]
  %v1161 = vld [vmem:[%s2 + $0xd8] sm:$0xf]
  %v1162 = vld [vmem:[%s2 + $0xdc] sm:$0xf]
  %v1163 = vld [vmem:[%s2 + $0xe0] sm:$0xf]
  %v1164 = vld [vmem:[%s2 + $0xe4] sm:$0xf]
  %v1165 = vld [vmem:[%s2 + $0xe8] sm:$0xf]
  %v1166 = vld [vmem:[%s2 + $0xec] sm:$0xf]
  %v1167 = vld [vmem:[%s2 + $0xf0] sm:$0xf]
  %v1168 = vld [vmem:[%s2 + $0xf4] sm:$0xf]
  %v1169 = vld [vmem:[%s2 + $0xf8] sm:$0xf]
  %v1170 = vld [vmem:[%s2 + $0xfc] sm:$0xf]
  %v1171 = vld [vmem:[%s2 + $0x100] sm:$0xf]
  %v1172 = vld [vmem:[%s2 + $0x104] sm:$0xf]
  %v1173 = vld [vmem:[%s2 + $0x108] sm:$0xf]
  %v1174 = vld [vmem:[%s2 + $0x10c] sm:$0xf]
  %v1175 = vld [vmem:[%s2 + $0x110] sm:$0xf]
  %v1176 = vld [vmem:[%s2 + $0x114] sm:$0xf]
  %v1177 = vld [vmem:[%s2 + $0x118] sm:$0xf]
  %v1178 = vld [vmem:[%s2 + $0x11c] sm:$0xf]
  %v1179 = vld [vmem:[%s2 + $0x120] sm:$0xf]
  %v1180 = vld [vmem:[%s2 + $0x124] sm:$0xf]
  %v1181 = vld [vmem:[%s2 + $0x128] sm:$0xf]
  %v1182 = vld [vmem:[%s2 + $0x12c] sm:$0xf]
  %v1183 = vld [vmem:[%s2 + $0x130] sm:$0xf]
  %v1184 = vld [vmem:[%s2 + $0x134] sm:$0xf]
  %v1185 = vld [vmem:[%s2 + $0x138] sm:$0xf]
  %v1186 = vld [vmem:[%s2 + $0x13c] sm:$0xf]
  %v1187 = vld [vmem:[%s2 + $0x140] sm:$0xf]
  %v1188 = vld [vmem:[%s2 + $0x144] sm:$0xf]
  %v1189 = vld [vmem:[%s2 + $0x148] sm:$0xf]
  %v1190 = vld [vmem:[%s2 + $0x14c] sm:$0xf]
  %v1191 = vld [vmem:[%s2 + $0x150] sm:$0xf]
  %v1192 = vld [vmem:[%s2 + $0x154] sm:$0xf]
  %v1193 = vld [vmem:[%s2 + $0x158] sm:$0xf]
  %v1194 = vld [vmem:[%s2 + $0x15c] sm:$0xf]
  %v1195 = vld [vmem:[%s2 + $0x160] sm:$0xf]
  %v1196 = vld [vmem:[%s2 + $0x164] sm:$0xf]
  %v1197 = vld [vmem:[%s2 + $0x168] sm:$0xf]
  %v1198 = vld [vmem:[%s2 + $0x16c] sm:$0xf]
  %v1199 = vld [vmem:[%s2 + $0x170] sm:$0xf]
  %v1200 = vld [vmem:[%s2 + $0x174] sm:$0xf]
  %v1201 = vld [vmem:[%s2 + $0x178] sm:$0xf]
  %v1202 = vld [vmem:[%s2 + $0x17c] sm:$0xf]
  %v1203 = vld [vmem:[%s2 + $0x180] sm:$0xf]
  %v1204 = vld [vmem:[%s2 + $0x184] sm:$0xf]
  %v1205 = vld [vmem:[%s2 + $0x188] sm:$0xf]
  %v1206 = vld [vmem:[%s2 + $0x18c] sm:$0xf]
  %v1307 = vunpack.c.l.b16 %v1107
  %v1308 = vunpack.c.l.b16 %v1108
  %v1309 = vunpack.c.l.b16 %v1109
  %v1310 = vunpack.c.l.b16 %v1110
  %v1311 = vunpack.c.l.b16 %v1111
  %v1312 = vunpack.c.l.b16 %v1112
  %v1313 = vunpack.c.l.b16 %v1113
  %v1314 = vunpack.c.l.b16 %v1114
  %v1315 = vunpack.c.l.b16 %v1115
  %v1316 = vunpack.c.l.b16 %v1116
  %v1317 = vunpack.c.l.b16 %v1117
  %v1318 = vunpack.c.l.b16 %v1118
  %v1319 = vunpack.c.l.b16 %v1119
  %v1320 = vunpack.c.l.b16 %v1120
  %v1321 = vunpack.c.l.b16 %v1121
  %v1322 = vunpack.c.l.b16 %v1122
  %v1323 = vunpack.c.l.b16 %v1123
  %v1324 = vunpack.c.l.b16 %v1124
  %v1325 = vunpack.c.l.b16 %v1125
  %v1326 = vunpack.c.l.b16 %v1126
  %v1327 = vunpack.c.l.b16 %v1127
  %v1328 = vunpack.c.l.b16 %v1128
  %v1329 = vunpack.c.l.b16 %v1129
  %v1330 = vunpack.c.l.b16 %v1130
  %v1331 = vunpack.c.l.b16 %v1131
  %v1332 = vunpack.c.l.b16 %v1132
  %v1333 = vunpack.c.l.b16 %v1133
  %v1334 = vunpack.c.l.b16 %v1134
  %v1335 = vunpack.c.l.b16 %v1135
  %v1336 = vunpack.c.l.b16 %v1136
  %v1337 = vunpack.c.l.b16 %v1137
  %v1338 = vunpack.c.l.b16 %v1138
  %v1339 = vunpack.c.l.b16 %v1139
  %v1340 = vunpack.c.l.b16 %v1140
  %v1341 = vunpack.c.l.b16 %v1141
  %v1342 = vunpack.c.l.b16 %v1142
  %v1343 = vunpack.c.l.b16 %v1143
  %v1344 = vunpack.c.l.b16 %v1144
  %v1345 = vunpack.c.l.b16 %v1145
  %v1346 = vunpack.c.l.b16 %v1146
  %v1347 = vunpack.c.l.b16 %v1147
  %v1348 = vunpack.c.l.b16 %v1148
  %v1349 = vunpack.c.l.b16 %v1149
  %v1350 = vunpack.c.l.b16 %v1150
  %v1351 = vunpack.c.l.b16 %v1151
  %v1352 = vunpack.c.l.b16 %v1152
  %v1353 = vunpack.c.l.b16 %v1153
  %v1354 = vunpack.c.l.b16 %v1154
  %v1355 = vunpack.c.l.b16 %v1155
  %v1356 = vunpack.c.l.b16 %v1156
  %v1357 = vunpack.c.l.b16 %v1157
  %v1358 = vunpack.c.l.b16 %v1158
  %v1359 = vunpack.c.l.b16 %v1159
  %v1360 = vunpack.c.l.b16 %v1160
  %v1361 = vunpack.c.l.b16 %v1161
  %v1362 = vunpack.c.l.b16 %v1162
  %v1363 = vunpack.c.l.b16 %v1163
  %v1364 = vunpack.c.l.b16 %v1164
  %v1365 = vunpack.c.l.b16 %v1165
  %v1366 = vunpack.c.l.b16 %v1166
  %v1367 = vunpack.c.l.b16 %v1167
  %v1368 = vunpack.c.l.b16 %v1168
  %v1369 = vunpack.c.l.b16 %v1169
  %v1370 = vunpack.c.l.b16 %v1170
  %v1371 = vunpack.c.l.b16 %v1171
  %v1372 = vunpack.c.l.b16 %v1172
  %v1373 = vunpack.c.l.b16 %v1173
  %v1374 = vunpack.c.l.b16 %v1174
  %v1375 = vunpack.c.l.b16 %v1175
  %v1376 = vunpack.c.l.b16 %v1176
  %v1377 = vunpack.c.l.b16 %v1177
  %v1378 = vunpack.c.l.b16 %v1178
  %v1379 = vunpack.c.l.b16 %v1179
  %v1380 = vunpack.c.l.b16 %v1180
  %v1381 = vunpack.c.l.b16 %v1181
  %v1382 = vunpack.c.l.b16 %v1182
  %v1383 = vunpack.c.l.b16 %v1183
  %v1384 = vunpack.c.l.b16 %v1184
  %v1385 = vunpack.c.l.b16 %v1185
  %v1386 = vunpack.c.l.b16 %v1186
  %v1387 = vunpack.c.l.b16 %v1187
  %v1388 = vunpack.c.l.b16 %v1188
  %v1389 = vunpack.c.l.b16 %v1189
  %v1390 = vunpack.c.l.b16 %v1190
  %v1391 = vunpack.c.l.b16 %v1191
  %v1392 = vunpack.c.l.b16 %v1192
  %v1393 = vunpack.c.l.b16 %v1193
  %v1394 = vunpack.c.l.b16 %v1194
  %v1395 = vunpack.c.l.b16 %v1195
  %v1396 = vunpack.c.l.b16 %v1196
  %v1397 = vunpack.c.l.b16 %v1197
  %v1398 = vunpack.c.l.b16 %v1198
  %v1399 = vunpack.c.l.b16 %v1199
  %v1400 = vunpack.c.l.b16 %v1200
  %v1401 = vunpack.c.l.b16 %v1201
  %v1402 = vunpack.c.l.b16 %v1202
  %v1403 = vunpack.c.l.b16 %v1203
  %v1404 = vunpack.c.l.b16 %v1204
  %v1405 = vunpack.c.l.b16 %v1205
  %v1406 = vunpack.c.l.b16 %v1206
  %v1407 = vpack.c.b16 %v1308, %v1307
  %v1408 = vpack.c.b16 %v1310, %v1309
  %v1409 = vpack.c.b16 %v1312, %v1311
  %v1410 = vpack.c.b16 %v1314, %v1313
  %v1411 = vpack.c.b16 %v1316, %v1315
  %v1412 = vpack.c.b16 %v1318, %v1317
  %v1413 = vpack.c.b16 %v1320, %v1319
  %v1414 = vpack.c.b16 %v1322, %v1321
  %v1415 = vpack.c.b16 %v1324, %v1323
  %v1416 = vpack.c.b16 %v1326, %v1325
  %v1417 = vpack.c.b16 %v1328, %v1327
  %v1418 = vpack.c.b16 %v1330, %v1329
  %v1419 = vpack.c.b16 %v1332, %v1331
  %v1420 = vpack.c.b16 %v1334, %v1333
  %v1421 = vpack.c.b16 %v1336, %v1335
  %v1422 = vpack.c.b16 %v1338, %v1337
  %v1423 = vpack.c.b16 %v1340, %v1339
  %v1424 = vpack.c.b16 %v1342, %v1341
  %v1425 = vpack.c.b16 %v1344, %v1343
  %v1426 = vpack.c.b16 %v1346, %v1345
  %v1427 = vpack.c.b16 %v1348, %v1347
  %v1428 = vpack.c.b16 %v1350, %v1349
  %v1429 = vpack.c.b16 %v1352, %v1351
  %v1430 = vpack.c.b16 %v1354, %v1353
  %v1431 = vpack.c.b16 %v1356, %v1355
  %v1432 = vpack.c.b16 %v1358, %v1357
  %v1433 = vpack.c.b16 %v1360, %v1359
  %v1434 = vpack.c.b16 %v1362, %v1361
  %v1435 = vpack.c.b16 %v1364, %v1363
  %v1436 = vpack.c.b16 %v1366, %v1365
  %v1437 = vpack.c.b16 %v1368, %v1367
  %v1438 = vpack.c.b16 %v1370, %v1369
  %v1439 = vpack.c.b16 %v1372, %v1371
  %v1440 = vpack.c.b16 %v1374, %v1373
  %v1441 = vpack.c.b16 %v1376, %v1375
  %v1442 = vpack.c.b16 %v1378, %v1377
  %v1443 = vpack.c.b16 %v1380, %v1379
  %v1444 = vpack.c.b16 %v1382, %v1381
  %v1445 = vpack.c.b16 %v1384, %v1383
  %v1446 = vpack.c.b16 %v1386, %v1385
  %v1447 = vpack.c.b16 %v1388, %v1387
  %v1448 = vpack.c.b16 %v1390, %v1389
  %v1449 = vpack.c.b16 %v1392, %v1391
  %v1450 = vpack.c.b16 %v1394, %v1393
  %v1451 = vpack.c.b16 %v1396, %v1395
  %v1452 = vpack.c.b16 %v1398, %v1397
  %v1453 = vpack.c.b16 %v1400, %v1399
  %v1454 = vpack.c.b16 %v1402, %v1401
  %v1455 = vpack.c.b16 %v1404, %v1403
  %v1456 = vpack.c.b16 %v1406, %v1405
  %v1508 = vsel %vm679, %v1106, 0
  %1510 = vmatprep.subr.bf16.mxu0 0
  %1511 = vmatpush1.bf16.msra.mxu0 %v1407
  %1512 = vmatprep.subr.bf16.mxu0 0
  %1513 = vmatpush1.bf16.msra.mxu0 %v1408
  %1514 = vmatprep.subr.bf16.mxu0 0
  %1515 = vmatpush1.bf16.msra.mxu0 %v1409
  %1516 = vmatprep.subr.bf16.mxu0 0
  %1517 = vmatpush1.bf16.msra.mxu0 %v1410
  %1518 = vmatprep.subr.bf16.mxu0 0
  %1519 = vmatpush1.bf16.msra.mxu0 %v1411
  %1520 = vmatprep.subr.bf16.mxu0 0
  %1521 = vmatpush1.bf16.msra.mxu0 %v1412
  %1522 = vmatprep.subr.bf16.mxu0 0
  %1523 = vmatpush1.bf16.msra.mxu0 %v1413
  %1524 = vmatprep.subr.bf16.mxu0 0
  %1525 = vmatpush1.bf16.msra.mxu0 %v1414
  %1526 = vmatprep.subr.bf16.mxu0 0
  %1527 = vmatpush1.bf16.msra.mxu0 %v1415
  %1528 = vmatprep.subr.bf16.mxu0 0
  %1529 = vmatpush1.bf16.msra.mxu0 %v1416
  %1530 = vmatprep.subr.bf16.mxu0 0
  %1531 = vmatpush1.bf16.msra.mxu0 %v1417
  %1532 = vmatprep.subr.bf16.mxu0 0
  %1533 = vmatpush1.bf16.msra.mxu0 %v1418
  %1534 = vmatprep.subr.bf16.mxu0 0
  %1535 = vmatpush1.bf16.msra.mxu0 %v1419
  %1536 = vmatprep.subr.bf16.mxu0 0
  %1537 = vmatpush1.bf16.msra.mxu0 %v1420
  %1538 = vmatprep.subr.bf16.mxu0 0
  %1539 = vmatpush1.bf16.msra.mxu0 %v1421
  %1540 = vmatprep.subr.bf16.mxu0 0
  %1541 = vmatpush1.bf16.msra.mxu0 %v1422
  %1542 = vmatprep.mubr.bf16.mxu0 %v1101
  %1543 = vmatmul.mubr.bf16.gmra.mrb[0].mxu0 %v1100
  %v1544 = vpop.f32.mrb[0].mxu0
  %v1545 = vadd.f32 0.0, %v1544
  %v1546 = vpop.f32.mrb[0].mxu0
  %v1547 = vpop.f32.mrb[0].mxu0
  %v1548 = vpop.f32.mrb[0].mxu0
  %1549 = vdwg.mxu0
  %1550 = vmatprep.subr.bf16.mxu0 0
  %1551 = vmatpush1.bf16.msra.mxu0 %v1423
  %1552 = vmatprep.subr.bf16.mxu0 0
  %1553 = vmatpush1.bf16.msra.mxu0 %v1424
  %1554 = vmatprep.subr.bf16.mxu0 0
  %1555 = vmatpush1.bf16.msra.mxu0 %v1425
  %1556 = vmatprep.subr.bf16.mxu0 0
  %1557 = vmatpush1.bf16.msra.mxu0 %v1426
  %1558 = vmatprep.subr.bf16.mxu0 0
  %1559 = vmatpush1.bf16.msra.mxu0 %v1427
  %1560 = vmatprep.subr.bf16.mxu0 0
  %1561 = vmatpush1.bf16.msra.mxu0 %v1428
  %1562 = vmatprep.subr.bf16.mxu0 0
  %1563 = vmatpush1.bf16.msra.mxu0 %v1429
  %1564 = vmatprep.subr.bf16.mxu0 0
  %1565 = vmatpush1.bf16.msra.mxu0 %v1430
  %1566 = vmatprep.subr.bf16.mxu0 0
  %1567 = vmatpush1.bf16.msra.mxu0 %v1431
  %1568 = vmatprep.subr.bf16.mxu0 0
  %1569 = vmatpush1.bf16.msra.mxu0 %v1432
  %1570 = vmatprep.subr.bf16.mxu0 0
  %1571 = vmatpush1.bf16.msra.mxu0 %v1433
  %1572 = vmatprep.subr.bf16.mxu0 0
  %1573 = vmatpush1.bf16.msra.mxu0 %v1434
  %1574 = vmatprep.subr.bf16.mxu0 0
  %1575 = vmatpush1.bf16.msra.mxu0 %v1435
  %1576 = vmatprep.subr.bf16.mxu0 0
  %1577 = vmatpush1.bf16.msra.mxu0 %v1436
  %1578 = vmatprep.subr.bf16.mxu0 0
  %1579 = vmatpush1.bf16.msra.mxu0 %v1437
  %1580 = vmatprep.subr.bf16.mxu0 0
  %1581 = vmatpush1.bf16.msra.mxu0 %v1438
  %1582 = vmatprep.mubr.bf16.mxu0 %v1103
  %1583 = vmatmul.mubr.bf16.gmra.mrb[0].mxu0 %v1102
  %v1584 = vpop.f32.mrb[0].mxu0
  %v1585 = vadd.f32 %v1545, %v1584
  %v1586 = vpop.f32.mrb[0].mxu0
  %v1587 = vpop.f32.mrb[0].mxu0
  %v1588 = vpop.f32.mrb[0].mxu0
  %1589 = vdwg.mxu0
  %1590 = vmatprep.subr.bf16.mxu0 0
  %1591 = vmatpush1.bf16.msra.mxu0 %v1439
  %1592 = vmatprep.subr.bf16.mxu0 0
  %1593 = vmatpush1.bf16.msra.mxu0 %v1440
  %1594 = vmatprep.subr.bf16.mxu0 0
  %1595 = vmatpush1.bf16.msra.mxu0 %v1441
  %1596 = vmatprep.subr.bf16.mxu0 0
  %1597 = vmatpush1.bf16.msra.mxu0 %v1442
  %1598 = vmatprep.subr.bf16.mxu0 0
  %1599 = vmatpush1.bf16.msra.mxu0 %v1443
  %1600 = vmatprep.subr.bf16.mxu0 0
  %1601 = vmatpush1.bf16.msra.mxu0 %v1444
  %1602 = vmatprep.subr.bf16.mxu0 0
  %1603 = vmatpush1.bf16.msra.mxu0 %v1445
  %1604 = vmatprep.subr.bf16.mxu0 0
  %1605 = vmatpush1.bf16.msra.mxu0 %v1446
  %1606 = vmatprep.subr.bf16.mxu0 0
  %1607 = vmatpush1.bf16.msra.mxu0 %v1447
  %1608 = vmatprep.subr.bf16.mxu0 0
  %1609 = vmatpush1.bf16.msra.mxu0 %v1448
  %1610 = vmatprep.subr.bf16.mxu0 0
  %1611 = vmatpush1.bf16.msra.mxu0 %v1449
  %1612 = vmatprep.subr.bf16.mxu0 0
  %1613 = vmatpush1.bf16.msra.mxu0 %v1450
  %1614 = vmatprep.subr.bf16.mxu0 0
  %1615 = vmatpush1.bf16.msra.mxu0 %v1451
  %1616 = vmatprep.subr.bf16.mxu0 0
  %1617 = vmatpush1.bf16.msra.mxu0 %v1452
  %1618 = vmatprep.subr.bf16.mxu0 0
  %1619 = vmatpush1.bf16.msra.mxu0 %v1453
  %1620 = vmatprep.subr.bf16.mxu0 0
  %1621 = vmatpush1.bf16.msra.mxu0 %v1454
  %1622 = vmatprep.mubr.bf16.mxu0 %v1105
  %1623 = vmatmul.mubr.bf16.gmra.mrb[0].mxu0 %v1104
  %v1624 = vpop.f32.mrb[0].mxu0
  %v1625 = vadd.f32 %v1585, %v1624
  %v1626 = vpop.f32.mrb[0].mxu0
  %v1627 = vpop.f32.mrb[0].mxu0
  %v1628 = vpop.f32.mrb[0].mxu0
  %1629 = vdwg.mxu0
  %1630 = vmatprep.subr.bf16.mxu0 0
  %1631 = vmatpush1.bf16.msra.mxu0 %v1455
  %1632 = vmatprep.subr.bf16.mxu0 0
  %1633 = vmatpush1.bf16.msra.mxu0 %v1456
  %1634 = vmatprep.subr.bf16.mxu0 0
  %1635 = vmatpush1.bf16.msra.mxu0 0
  %1636 = vmatprep.subr.bf16.mxu0 0
  %1637 = vmatpush1.bf16.msra.mxu0 0
  %1638 = vmatprep.subr.bf16.mxu0 0
  %1639 = vmatpush1.bf16.msra.mxu0 0
  %1640 = vmatprep.subr.bf16.mxu0 0
  %1641 = vmatpush1.bf16.msra.mxu0 0
  %1642 = vmatprep.subr.bf16.mxu0 0
  %1643 = vmatpush1.bf16.msra.mxu0 0
  %1644 = vmatprep.subr.bf16.mxu0 0
  %1645 = vmatpush1.bf16.msra.mxu0 0
  %1646 = vmatprep.subr.bf16.mxu0 0
  %1647 = vmatpush1.bf16.msra.mxu0 0
  %1648 = vmatprep.subr.bf16.mxu0 0
  %1649 = vmatpush1.bf16.msra.mxu0 0
  %1650 = vmatprep.subr.bf16.mxu0 0
  %1651 = vmatpush1.bf16.msra.mxu0 0
  %1652 = vmatprep.subr.bf16.mxu0 0
  %1653 = vmatpush1.bf16.msra.mxu0 0
  %1654 = vmatprep.subr.bf16.mxu0 0
  %1655 = vmatpush1.bf16.msra.mxu0 0
  %1656 = vmatprep.subr.bf16.mxu0 0
  %1657 = vmatpush1.bf16.msra.mxu0 0
  %1658 = vmatprep.subr.bf16.mxu0 0
  %1659 = vmatpush1.bf16.msra.mxu0 0
  %1660 = vmatprep.subr.bf16.mxu0 0
  %1661 = vmatpush1.bf16.msra.mxu0 0
  %1662 = vmatprep.mubr.bf16.mxu0 0
  %1663 = vmatmul.mubr.bf16.gmra.mrb[0].mxu0 %v1508
  %v1664 = vpop.f32.mrb[0].mxu0
  %v1665 = vadd.f32 %v1625, %v1664
  %v1666 = vpop.f32.mrb[0].mxu0
  %v1667 = vpop.f32.mrb[0].mxu0
  %v1668 = vpop.f32.mrb[0].mxu0
  %1669 = vdwg.mxu0
  %vm1670 = vcmask 523264
  %1671 = vst.msk [vmem:[%s4] sm:$0xff] %vm1670, %v1665
  %1673 = vrot.lane.b32.xlu0 %v1665, 64
  %v1674 = vpop.permute.xlu0 %1673
  %1676 = vst.msk [vmem:[%s4 + $0x8] sm:$0xff] %vm1670, %v1674
  // Predicated region
  $region18: #{resblock_down.1} parent=0 // pred_check
    _
  $region19: #{resblock_down.1} parent=0 // pred_check_branch
    %1678 = sbr.rel (0) target = $region21
  $region20: #{resblock_down.1} parent=0 // pred_region
    _
  $region21: #{resblock_down.1} parent=0 // pred_fallthru
    _
  // Predicated region
  $region22: #{resblock_down.1} parent=0 // pred_check
    _
  $region23: #{resblock_down.1} parent=0 // pred_check_branch
    %1680 = sbr.rel (0) target = $region25
  $region24: #{resblock_down.1} parent=0 // pred_region
    _
  $region25: #{resblock_down.1} parent=0 // pred_fallthru
    _

</llo_original>
